<compile_context>
chip_gen: v5e
topology: v5e:2x2
jax: 0.10.0
libtpu: 0.0.40
codegen_flags: <defaults>
</compile_context>

<pallas_src>
import functools

import jax
import jax.numpy as jnp
from jax.experimental import pallas as pl
from jax.experimental.pallas import tpu as pltpu

_LANE = 128  # fc3 padded to one full lane width; packed output is 128 wide.


def _round_up(n, m):
    return ((n + m - 1) // m) * m


def _default_use_bf16():
    """bf16 MXU operands by default on v6e/v7x; f32 on v5e and older."""
    try:
        kind = jax.devices()[0].device_kind.lower()
    except Exception:
        return False
    if "tpu" not in kind and not kind.startswith("v"):
        return False
    return not any(t in kind for t in ("v2", "v3", "v4", "v5"))


def _vmem_limit_bytes(tile_b, D, Hp, mxu_elem_bytes, packed):
    """Scoped-VMEM request: single-buffered weights + pipelined x/out tiles +
    compiler-materialized h1/h2/cast/transpose temporaries, plus headroom."""
    weights = (D * Hp + Hp * Hp + Hp * _LANE) * mxu_elem_bytes + (2 * Hp + _LANE) * 4
    x_tile = 2 * tile_b * D * mxu_elem_bytes                 # double-buffered
    out_rows = (tile_b // _LANE) if packed else tile_b
    out_tile = 2 * out_rows * _LANE * 4
    temps = 6 * tile_b * max(Hp, _LANE) * 4                  # h1/h2/casts/fc3-out
    total = weights + x_tile + out_tile + temps + (4 << 20)  # headroom
    return int(min(max(total, 32 << 20), 96 << 20))


def _mlp_kernel(x_ref, w1_ref, b1_ref, w2_ref, b2_ref, w3_ref, b3_ref, o_ref,
                *, packed, precision):
    """Whole forward pass for one batch tile, everything resident in VMEM.

    Matmul operands may be bf16 (wrapper decides); accumulation, bias-add and
    relu are always f32.
    """
    x = x_ref[...]                                                     # (TB, D)
    h1 = jnp.dot(x, w1_ref[...], preferred_element_type=jnp.float32,
                 precision=precision) + b1_ref[...]
    h1 = jnp.maximum(h1, 0.0)                                          # relu, f32
    h2 = jnp.dot(h1.astype(w2_ref.dtype), w2_ref[...],
                 preferred_element_type=jnp.float32,
                 precision=precision) + b2_ref[...]
    h2 = jnp.maximum(h2, 0.0)                                          # relu, f32
    out = jnp.dot(h2.astype(w3_ref.dtype), w3_ref[...],
                  preferred_element_type=jnp.float32,
                  precision=precision) + b3_ref[...]                   # (TB, 128)
    if packed:
        # Lane-pack: column 0 of each 128-row block becomes one dense 128-lane
        # output row.  128x128 transposes run on the XLU (slack) and the store
        # is an unmasked full-lane vst; HBM writeback is tile_b*4 bytes.
        tb = out.shape[0]
        for r in range(tb // _LANE):                # static unroll, <= 8 iters
            blk_t = jnp.transpose(out[r * _LANE:(r + 1) * _LANE, :])   # (128,128)
            o_ref[r:r + 1, :] = blk_t[0:1, :].astype(o_ref.dtype)
    else:
        # Fallback: lane-padded (TB, 128) output; only column 0 is real.
        o_ref[...] = out.astype(o_ref.dtype)


@functools.partial(jax.jit,
                   static_argnames=("tile_b", "use_bf16_matmul", "packed_output"))
def _forward(x, params, *, tile_b, use_bf16_matmul, packed_output):
    B, D = x.shape
    H = params["w1"].shape[1]
    Hp = _round_up(H, _LANE)   # lane-dense hidden dim (zero-padding is exact)

    w1, b1 = params["w1"], params["b1"]
    w2, b2 = params["w2"], params["b2"]
    w3, b3 = params["w3"], params["b3"]

    if Hp != H:
        # Zero-padded hidden units: relu(0 + 0) = 0, and their zeroed fan-out
        # rows contribute nothing, so the math is unchanged.
        w1 = jnp.pad(w1, ((0, 0), (0, Hp - H)))
        b1 = jnp.pad(b1, ((0, 0), (0, Hp - H)))
        w2 = jnp.pad(w2, ((0, Hp - H), (0, Hp - H)))
        b2 = jnp.pad(b2, ((0, 0), (0, Hp - H)))
        w3 = jnp.pad(w3, ((0, Hp - H), (0, 0)))

    # fc3 padded to a full 128-lane output: lane-dense MXU pass; col 0 is real.
    w3p = jnp.pad(w3, ((0, 0), (0, _LANE - w3.shape[1])))
    b3p = jnp.pad(b3, ((0, 0), (0, _LANE - b3.shape[1])))

    # --- batch tiling -------------------------------------------------------
    if packed_output:
        # Packed output array is (Bp//128, 128); its block is (tile_b//128, 128)
        # so tile_b//128 must be a multiple of 8 (=> tile_b=1024) or the block
        # must span the whole array (single grid step).
        if tile_b is None:
            Bp = _round_up(B, _LANE)
            if Bp <= 1024:
                tile_b = Bp                      # single grid step
            else:
                tile_b = 1024                    # aligned multi-step tiling
                Bp = _round_up(B, tile_b)
        else:
            assert tile_b % _LANE == 0, "packed output needs tile_b % 128 == 0"
            Bp = _round_up(B, tile_b)
            assert (tile_b // _LANE) % 8 == 0 or Bp == tile_b, (
                "packed output needs tile_b % 1024 == 0 or a single grid step")
    else:
        sub = 16 if use_bf16_matmul else 8       # bf16 packs 16 sublanes/vreg
        if tile_b is None:
            tile_b = min(_round_up(B, sub), 512)
        assert tile_b % sub == 0, f"tile_b must be a multiple of {sub}"
        Bp = _round_up(B, tile_b)

    xp = x if Bp == B else jnp.pad(x, ((0, Bp - B), (0, 0)))

    if use_bf16_matmul:
        # bf16 only on MXU operands (NOTE: this quantises x itself to bf16);
        # biases / relu / accumulation stay f32.
        xp = xp.astype(jnp.bfloat16)
        w1 = w1.astype(jnp.bfloat16)
        w2 = w2.astype(jnp.bfloat16)
        w3p = w3p.astype(jnp.bfloat16)
        mxu_precision = jax.lax.Precision.DEFAULT
        mxu_elem_bytes = 2
    else:
        mxu_precision = jax.lax.Precision.HIGHEST   # f32 parity with torch
        mxu_elem_bytes = 4

    grid = (Bp // tile_b,)
    n_blk = tile_b // _LANE

    # Grid-invariant weights/biases: constant index_map (DMA'd once) and
    # Buffered(1) so they are single-buffered (no wasted 2x VMEM).
    def _resident(shape):
        return pl.BlockSpec(shape, lambda i: (0, 0), pipeline_mode=pl.Buffered(1))

    if packed_output:
        out_shape = jax.ShapeDtypeStruct((Bp // _LANE, _LANE), jnp.float32)
        out_spec = pl.BlockSpec((n_blk, _LANE), lambda i: (i, 0))
    else:
        out_shape = jax.ShapeDtypeStruct((Bp, _LANE), jnp.float32)
        out_spec = pl.BlockSpec((tile_b, _LANE), lambda i: (i, 0))

    kernel = functools.partial(_mlp_kernel, packed=packed_output,
                               precision=mxu_precision)

    out = pl.pallas_call(
        kernel,
        out_shape=out_shape,
        grid_spec=pltpu.PrefetchScalarGridSpec(
            num_scalar_prefetch=0,
            grid=grid,
            in_specs=[
                pl.BlockSpec((tile_b, D), lambda i: (i, 0)),   # x tile (pipelined)
                _resident((D, Hp)),                            # w1
                _resident((1, Hp)),                            # b1
                _resident((Hp, Hp)),                           # w2
                _resident((1, Hp)),                            # b2
                _resident((Hp, _LANE)),                        # w3 (lane-padded)
                _resident((1, _LANE)),                         # b3 (lane-padded)
            ],
            out_specs=out_spec,
        ),
        compiler_params=pltpu.CompilerParams(
            dimension_semantics=("parallel",),
            vmem_limit_bytes=_vmem_limit_bytes(tile_b, D, Hp,
                                               mxu_elem_bytes, packed_output),
        ),
    )(xp, w1, b1, w2, b2, w3p, b3p)

    if packed_output:
        # (Bp//128, 128) row-major == batch order.
        return out.reshape(Bp, 1)[:B]
    return out[:B, :1]


def value_network_forward(x, params, *, tile_b=None, use_bf16_matmul=None,
                          packed_output=True):
    """x: (B, input_dim) f32.  params: dict w1,b1,w2,b2,w3,b3.  Returns (B, 1).

    use_bf16_matmul=None auto-selects: bf16 MXU operands on v6e/v7x, f32 on
    v5e and older.
    """
    if use_bf16_matmul is None:
        use_bf16_matmul = _default_use_bf16()
    return _forward(x, params, tile_b=tile_b, use_bf16_matmul=use_bf16_matmul,
                    packed_output=packed_output)


def init_params(key, input_dim, hidden_dim):
    """Deterministic init mirroring nn.Linear's U(-1/sqrt(fan_in), 1/sqrt(fan_in))."""
    ks = jax.random.split(key, 6)

    def linear(kw, kb, fan_in, fan_out):
        bound = 1.0 / jnp.sqrt(fan_in)
        w = jax.random.uniform(kw, (fan_in, fan_out), jnp.float32, -bound, bound)
        b = jax.random.uniform(kb, (1, fan_out), jnp.float32, -bound, bound)
        return w, b

    w1, b1 = linear(ks[0], ks[1], input_dim, hidden_dim)
    w2, b2 = linear(ks[2], ks[3], hidden_dim, hidden_dim)
    w3, b3 = linear(ks[4], ks[5], hidden_dim, 1)
    return {"w1": w1, "b1": b1, "w2": w2, "b2": b2, "w3": w3, "b3": b3}


def reference_forward(x, p):
    hi = jax.lax.Precision.HIGHEST
    h1 = jnp.maximum(jnp.dot(x, p["w1"], precision=hi) + p["b1"], 0.0)
    h2 = jnp.maximum(jnp.dot(h1, p["w2"], precision=hi) + p["b2"], 0.0)
    return jnp.dot(h2, p["w3"], precision=hi) + p["b3"]


if __name__ == "__main__":
    key = jax.random.PRNGKey(0)
    k_param, k_x = jax.random.split(key)

    batch, input_dim, hidden_dim = 8, 16, 32
    params = init_params(k_param, input_dim, hidden_dim)
    x = jax.random.normal(k_x, (batch, input_dim), jnp.float32)
    ref = reference_forward(x, params)

    # f32, packed lane-dense output, single grid step.
    out = jax.block_until_ready(value_network_forward(x, params, use_bf16_matmul=False))
    assert out.shape == (batch, 1), out.shape
    assert jnp.allclose(out, ref, atol=1e-5, rtol=1e-5), "f32 mismatch vs reference"

    # Ragged batch (not a multiple of 128) — exercises wrapper-side padding.
    x2 = jax.random.normal(jax.random.PRNGKey(1), (20, input_dim), jnp.float32)
    out2 = jax.block_until_ready(value_network_forward(x2, params, use_bf16_matmul=False))
    ref2 = reference_forward(x2, params)
    assert out2.shape == (20, 1), out2.shape
    assert jnp.allclose(out2, ref2, atol=1e-5, rtol=1e-5), "ragged mismatch"

    # Multi-step grid (2048 rows -> 2 tiles of 1024): exercises Buffered(1)
    # resident weights + pipelined x tiles + multi-block packed output.
    x3 = jax.random.normal(jax.random.PRNGKey(2), (2048, input_dim), jnp.float32)
    out3 = jax.block_until_ready(value_network_forward(x3, params, use_bf16_matmul=False))
    ref3 = reference_forward(x3, params)
    assert out3.shape == (2048, 1), out3.shape
    assert jnp.allclose(out3, ref3, atol=1e-5, rtol=1e-5), "multi-tile mismatch"

    # Non-packed fallback path (lane-padded (Bp,128) f32 output).
    out4 = jax.block_until_ready(
        value_network_forward(x, params, use_bf16_matmul=False, packed_output=False))
    assert out4.shape == (batch, 1), out4.shape
    assert jnp.allclose(out4, ref, atol=1e-5, rtol=1e-5), "fallback mismatch"

    # bf16 MXU path (v6e/v7x fast path), f32 accumulation — looser tolerance.
    out5 = jax.block_until_ready(
        value_network_forward(x, params, use_bf16_matmul=True))
    assert out5.shape == (batch, 1), out5.shape
    assert jnp.allclose(out5, ref, atol=1e-1, rtol=1e-1), "bf16 mismatch"

    # Chip-default path (auto bf16 on v6e/v7x, f32 elsewhere).
    out6 = jax.block_until_ready(value_network_forward(x, params))
    assert jnp.allclose(out6, ref, atol=1e-1, rtol=1e-1), "default-path mismatch"

    print("KERNEL_OK")
</pallas_src>

<mosaic_0001>
module attributes {stable_mosaic.version = 11 : i64} {
  func.func @_mlp_kernel(%arg0: i32, %arg1: memref<128x16xf32, #tpu.memory_space<vmem>>, %arg2: memref<16x128xf32, #tpu.memory_space<vmem>>, %arg3: memref<1x128xf32, #tpu.memory_space<vmem>>, %arg4: memref<128x128xf32, #tpu.memory_space<vmem>>, %arg5: memref<1x128xf32, #tpu.memory_space<vmem>>, %arg6: memref<128x128xf32, #tpu.memory_space<vmem>>, %arg7: memref<1x128xf32, #tpu.memory_space<vmem>>, %arg8: memref<1x128xf32, #tpu.memory_space<vmem>>) attributes {dimension_semantics = [#tpu.dimension_semantics<parallel>], iteration_bounds = array<i64: 1>, scalar_prefetch = 0 : i64, scratch_operands = 0 : i64, tpu.core_type = #tpu.core_type<tc>, window_params = [{transform_indices = @transform_0, window_bounds = array<i64: 128, 16>}, {pipeline_mode = #tpu.pipeline_mode<synchronous>, transform_indices = @transform_1, window_bounds = array<i64: 16, 128>}, {pipeline_mode = #tpu.pipeline_mode<synchronous>, transform_indices = @transform_2, window_bounds = array<i64: 1, 128>}, {pipeline_mode = #tpu.pipeline_mode<synchronous>, transform_indices = @transform_3, window_bounds = array<i64: 128, 128>}, {pipeline_mode = #tpu.pipeline_mode<synchronous>, transform_indices = @transform_4, window_bounds = array<i64: 1, 128>}, {pipeline_mode = #tpu.pipeline_mode<synchronous>, transform_indices = @transform_5, window_bounds = array<i64: 128, 128>}, {pipeline_mode = #tpu.pipeline_mode<synchronous>, transform_indices = @transform_6, window_bounds = array<i64: 1, 128>}, {transform_indices = @transform_7, window_bounds = array<i64: 1, 128>}]} {
    %c0 = arith.constant 0 : index
    %c0_0 = arith.constant 0 : index
    %0 = vector.load %arg1[%c0, %c0_0] : memref<128x16xf32, #tpu.memory_space<vmem>>, vector<128x16xf32>
    %c0_1 = arith.constant 0 : index
    %c0_2 = arith.constant 0 : index
    %1 = vector.load %arg2[%c0_1, %c0_2] : memref<16x128xf32, #tpu.memory_space<vmem>>, vector<16x128xf32>
    %cst = arith.constant dense<0.000000e+00> : vector<128x128xf32>
    %2 = tpu.matmul %0, %1, %cst {dimension_numbers = #tpu.dot_dimension_numbers<[1], [0], [0], [1], [0, 0, 1, 1], [], []>, precision = #tpu.contract_precision<fp32>} : vector<128x16xf32>, vector<16x128xf32>, vector<128x128xf32> -> vector<128x128xf32>
    %c0_3 = arith.constant 0 : index
    %c0_4 = arith.constant 0 : index
    %3 = vector.load %arg3[%c0_3, %c0_4] : memref<1x128xf32, #tpu.memory_space<vmem>>, vector<1x128xf32>
    %4 = vector.broadcast %3 : vector<1x128xf32> to vector<128x128xf32>
    %5 = arith.addf %2, %4 : vector<128x128xf32>
    %cst_5 = arith.constant 0.000000e+00 : f32
    %6 = vector.broadcast %cst_5 : f32 to vector<128x128xf32>
    %7 = arith.maximumf %5, %6 : vector<128x128xf32>
    %c0_6 = arith.constant 0 : index
    %c0_7 = arith.constant 0 : index
    %8 = vector.load %arg4[%c0_6, %c0_7] : memref<128x128xf32, #tpu.memory_space<vmem>>, vector<128x128xf32>
    %cst_8 = arith.constant dense<0.000000e+00> : vector<128x128xf32>
    %9 = tpu.matmul %7, %8, %cst_8 {dimension_numbers = #tpu.dot_dimension_numbers<[1], [0], [0], [1], [0, 0, 1, 1], [], []>, precision = #tpu.contract_precision<fp32>} : vector<128x128xf32>, vector<128x128xf32>, vector<128x128xf32> -> vector<128x128xf32>
    %c0_9 = arith.constant 0 : index
    %c0_10 = arith.constant 0 : index
    %10 = vector.load %arg5[%c0_9, %c0_10] : memref<1x128xf32, #tpu.memory_space<vmem>>, vector<1x128xf32>
    %11 = vector.broadcast %10 : vector<1x128xf32> to vector<128x128xf32>
    %12 = arith.addf %9, %11 : vector<128x128xf32>
    %cst_11 = arith.constant 0.000000e+00 : f32
    %13 = vector.broadcast %cst_11 : f32 to vector<128x128xf32>
    %14 = arith.maximumf %12, %13 : vector<128x128xf32>
    %c0_12 = arith.constant 0 : index
    %c0_13 = arith.constant 0 : index
    %15 = vector.load %arg6[%c0_12, %c0_13] : memref<128x128xf32, #tpu.memory_space<vmem>>, vector<128x128xf32>
    %cst_14 = arith.constant dense<0.000000e+00> : vector<128x128xf32>
    %16 = tpu.matmul %14, %15, %cst_14 {dimension_numbers = #tpu.dot_dimension_numbers<[1], [0], [0], [1], [0, 0, 1, 1], [], []>, precision = #tpu.contract_precision<fp32>} : vector<128x128xf32>, vector<128x128xf32>, vector<128x128xf32> -> vector<128x128xf32>
    %c0_15 = arith.constant 0 : index
    %c0_16 = arith.constant 0 : index
    %17 = vector.load %arg7[%c0_15, %c0_16] : memref<1x128xf32, #tpu.memory_space<vmem>>, vector<1x128xf32>
    %18 = vector.broadcast %17 : vector<1x128xf32> to vector<128x128xf32>
    %19 = arith.addf %16, %18 : vector<128x128xf32>
    %20 = tpu.transpose %19, [1, 0] : vector<128x128xf32> -> vector<128x128xf32>
    %21 = vector.extract_strided_slice %20 {offsets = [0, 0], sizes = [1, 128], strides = [1, 1]} : vector<128x128xf32> to vector<1x128xf32>
    %c0_17 = arith.constant 0 : index
    %c0_18 = arith.constant 0 : index
    %22 = vector.load %arg8[%c0_17, %c0_18] : memref<1x128xf32, #tpu.memory_space<vmem>>, vector<1x128xf32>
    tpu.vector_store %arg8[%c0_17, %c0_18], %21 {strides = array<i32>} : memref<1x128xf32, #tpu.memory_space<vmem>>, vector<1x128xf32>,
    return
  }
  func.func @transform_0(%arg0: i32) -> (i32, i32) {
    %c0_i32 = arith.constant 0 : i32
    %c0_i32_0 = arith.constant 0 : i32
    return %arg0, %c0_i32 : i32, i32
  }
  func.func @transform_1(%arg0: i32) -> (i32, i32) {
    %c0_i32 = arith.constant 0 : i32
    %c0_i32_0 = arith.constant 0 : i32
    %c0_i32_1 = arith.constant 0 : i32
    return %c0_i32, %c0_i32_0 : i32, i32
  }
  func.func @transform_2(%arg0: i32) -> (i32, i32) {
    %c0_i32 = arith.constant 0 : i32
    %c0_i32_0 = arith.constant 0 : i32
    %c0_i32_1 = arith.constant 0 : i32
    return %c0_i32, %c0_i32_0 : i32, i32
  }
  func.func @transform_3(%arg0: i32) -> (i32, i32) {
    %c0_i32 = arith.constant 0 : i32
    %c0_i32_0 = arith.constant 0 : i32
    %c0_i32_1 = arith.constant 0 : i32
    return %c0_i32, %c0_i32_0 : i32, i32
  }
  func.func @transform_4(%arg0: i32) -> (i32, i32) {
    %c0_i32 = arith.constant 0 : i32
    %c0_i32_0 = arith.constant 0 : i32
    %c0_i32_1 = arith.constant 0 : i32
    return %c0_i32, %c0_i32_0 : i32, i32
  }
  func.func @transform_5(%arg0: i32) -> (i32, i32) {
    %c0_i32 = arith.constant 0 : i32
    %c0_i32_0 = arith.constant 0 : i32
    %c0_i32_1 = arith.constant 0 : i32
    return %c0_i32, %c0_i32_0 : i32, i32
  }
  func.func @transform_6(%arg0: i32) -> (i32, i32) {
    %c0_i32 = arith.constant 0 : i32
    %c0_i32_0 = arith.constant 0 : i32
    %c0_i32_1 = arith.constant 0 : i32
    return %c0_i32, %c0_i32_0 : i32, i32
  }
  func.func @transform_7(%arg0: i32) -> (i32, i32) {
    %c0_i32 = arith.constant 0 : i32
    %c0_i32_0 = arith.constant 0 : i32
    return %arg0, %c0_i32 : i32, i32
  }
}

</mosaic_0001>

<llo_original>
// kernel: _forward.1
$region0: #{_forward.1}
  #allocation0 [shape = 'u32[]', space=smem, size = 0x4, offset = 0x4, fixed_abs, tag = 'smem constant byte address 0x4 - core index']
  #allocation1 [shape = 'u32[72,128]{1,0:T(1,128)}', space=vmem, size = 0x9000, scoped, tag = 'internal scratch']
  %s0 = inlined_call_operand.vmem [shape: f32[128,16], index: 0, kind: input, shape index: {}]
  %s1 = inlined_call_operand.vmem [shape: f32[16,128], index: 1, kind: input, shape index: {}]
  %s2 = inlined_call_operand.vmem [shape: f32[1,128], index: 2, kind: input, shape index: {}]
  %s3 = inlined_call_operand.vmem [shape: f32[128,128], index: 3, kind: input, shape index: {}]
  %s4 = inlined_call_operand.vmem [shape: f32[1,128], index: 4, kind: input, shape index: {}]
  %s5 = inlined_call_operand.vmem [shape: f32[128,128], index: 5, kind: input, shape index: {}]
  %s6 = inlined_call_operand.vmem [shape: f32[1,128], index: 6, kind: input, shape index: {}]
  %s7 = inlined_call_operand.vmem [shape: f32[1,128], index: 7, kind: output, shape index: {}]
  %s8 = sld [smem:[#allocation0]]
  $region38: #{_forward.1} parent=0
    _
  %s10 = ssub.s32 1, %s8
  %s11 = scalar_select 0, %s10, %s8
  // Predicated region
  $region2: #{_forward.1} parent=0 // pred_check
    _
  $region3: #{_forward.1} parent=0 // pred_check_branch
    %13 = sbr.rel (0) target = $region5
  $region4: #{_forward.1} parent=0 // pred_region
    _
  $region5: #{_forward.1} parent=0 // pred_fallthru
    _
  // Predicated region
  $region6: #{_forward.1} parent=0 // pred_check
    _
  $region7: #{_forward.1} parent=0 // pred_check_branch
    %15 = sbr.rel (0) target = $region9
  $region8: #{_forward.1} parent=0 // pred_region
    _
  $region9: #{_forward.1} parent=0 // pred_fallthru
    _
  // Predicated region
  $region10: #{_forward.1} parent=0 // pred_check
    _
  $region11: #{_forward.1} parent=0 // pred_check_branch
    %17 = sbr.rel (0) target = $region13
  $region12: #{_forward.1} parent=0 // pred_region
    _
  $region13: #{_forward.1} parent=0 // pred_fallthru
    _
  // Predicated region
  $region14: #{_forward.1} parent=0 // pred_check
    _
  $region15: #{_forward.1} parent=0 // pred_check_branch
    %19 = sbr.rel (0) target = $region17
  $region16: #{_forward.1} parent=0 // pred_region
    _
  $region17: #{_forward.1} parent=0 // pred_fallthru
    _
  // Predicated region
  $region18: #{_forward.1} parent=0 // pred_check
    _
  $region19: #{_forward.1} parent=0 // pred_check_branch
    %21 = sbr.rel (0) target = $region21
  $region20: #{_forward.1} parent=0 // pred_region
    _
  $region21: #{_forward.1} parent=0 // pred_fallthru
    _
  // Predicated region
  $region22: #{_forward.1} parent=0 // pred_check
    _
  $region23: #{_forward.1} parent=0 // pred_check_branch
    %23 = sbr.rel (0) target = $region25
  $region24: #{_forward.1} parent=0 // pred_region
    _
  $region25: #{_forward.1} parent=0 // pred_fallthru
    _
  // Predicated region
  $region26: #{_forward.1} parent=0 // pred_check
    _
  $region27: #{_forward.1} parent=0 // pred_check_branch
    %25 = sbr.rel (0) target = $region29
  $region28: #{_forward.1} parent=0 // pred_region
    _
  $region29: #{_forward.1} parent=0 // pred_fallthru
    _
  %v26 = vld [vmem:[%s0] sm:$0xff]
  %v27 = vld [vmem:[%s0 + $0x8] sm:$0xff]
  %v28 = vld [vmem:[%s0 + $0x10] sm:$0xff]
  %v29 = vld [vmem:[%s0 + $0x18] sm:$0xff]
  %v30 = vld [vmem:[%s0 + $0x20] sm:$0xff]
  %v31 = vld [vmem:[%s0 + $0x28] sm:$0xff]
  %v32 = vld [vmem:[%s0 + $0x30] sm:$0xff]
  %v33 = vld [vmem:[%s0 + $0x38] sm:$0xff]
  %v34 = vld [vmem:[%s0 + $0x40] sm:$0xff]
  %v35 = vld [vmem:[%s0 + $0x48] sm:$0xff]
  %v36 = vld [vmem:[%s0 + $0x50] sm:$0xff]
  %v37 = vld [vmem:[%s0 + $0x58] sm:$0xff]
  %v38 = vld [vmem:[%s0 + $0x60] sm:$0xff]
  %v39 = vld [vmem:[%s0 + $0x68] sm:$0xff]
  %v40 = vld [vmem:[%s0 + $0x70] sm:$0xff]
  %v41 = vld [vmem:[%s0 + $0x78] sm:$0xff]
  %v42 = vld [vmem:[%s1] sm:$0xff]
  %v43 = vld [vmem:[%s1 + $0x8] sm:$0xff]
  %v44 = vld [vmem:[%s2] sm:$0x1]
  %v46 = vperm.slane %v44, 0
  %vm48 = vcmask 130048
  %v50 = vsel %vm48, %v26, 0
  %v53 = vsel %vm48, %v27, 0
  %v56 = vsel %vm48, %v28, 0
  %v59 = vsel %vm48, %v29, 0
  %v62 = vsel %vm48, %v30, 0
  %v65 = vsel %vm48, %v31, 0
  %v68 = vsel %vm48, %v32, 0
  %v71 = vsel %vm48, %v33, 0
  %v74 = vsel %vm48, %v34, 0
  %v77 = vsel %vm48, %v35, 0
  %v80 = vsel %vm48, %v36, 0
  %v83 = vsel %vm48, %v37, 0
  %v86 = vsel %vm48, %v38, 0
  %v89 = vsel %vm48, %v39, 0
  %v92 = vsel %vm48, %v40, 0
  %v95 = vsel %vm48, %v41, 0
  %97 = vmatpush.msra.mxu0 0.0
  %98 = vmatpush.msra.mxu0 0.0
  %99 = vmatpush.msra.mxu0 0.0
  %100 = vmatpush.msra.mxu0 0.0
  %101 = vmatpush.msra.mxu0 0.0
  %102 = vmatpush.msra.mxu0 0.0
  %103 = vmatpush.msra.mxu0 0.0
  %104 = vmatpush.msra.mxu0 0.0
  %105 = vmatpush.msra.mxu0 0.0
  %106 = vmatpush.msra.mxu0 0.0
  %107 = vmatpush.msra.mxu0 0.0
  %108 = vmatpush.msra.mxu0 0.0
  %109 = vmatpush.msra.mxu0 0.0
  %110 = vmatpush.msra.mxu0 0.0
  %v111 = vand.u32 %v43, 4294901760
  %112 = vmatpush.msra.mxu0 %v111
  %v113 = vand.u32 %v42, 4294901760
  %114 = vmatpush.msra.mxu0 %v113
  %v115 = vand.u32 %v50, 4294901760
  %v116 = vsub.f32 %v50, %v115
  %v117 = vand.u32 %v116, 4294901760
  %v118 = vsub.f32 %v116, %v117
  %v119 = vand.u32 %v118, 4294901760
  %120 = vmatmul.f32.gmra.mxu0 %v119
  %v121 = vpop.f32.mrf.mxu0
  %v122 = vadd.f32 %v46, %v121
  %v123 = vand.u32 %v53, 4294901760
  %v124 = vsub.f32 %v53, %v123
  %v125 = vand.u32 %v124, 4294901760
  %v126 = vsub.f32 %v124, %v125
  %v127 = vand.u32 %v126, 4294901760
  %128 = vmatmul.f32.gmra.mxu0 %v127
  %v129 = vpop.f32.mrf.mxu0
  %v130 = vadd.f32 %v46, %v129
  %v131 = vand.u32 %v56, 4294901760
  %v132 = vsub.f32 %v56, %v131
  %v133 = vand.u32 %v132, 4294901760
  %v134 = vsub.f32 %v132, %v133
  %v135 = vand.u32 %v134, 4294901760
  %136 = vmatmul.f32.gmra.mxu0 %v135
  %v137 = vpop.f32.mrf.mxu0
  %v138 = vadd.f32 %v46, %v137
  %v139 = vand.u32 %v59, 4294901760
  %v140 = vsub.f32 %v59, %v139
  %v141 = vand.u32 %v140, 4294901760
  %v142 = vsub.f32 %v140, %v141
  %v143 = vand.u32 %v142, 4294901760
  %144 = vmatmul.f32.gmra.mxu0 %v143
  %v145 = vpop.f32.mrf.mxu0
  %v146 = vadd.f32 %v46, %v145
  %v147 = vand.u32 %v62, 4294901760
  %v148 = vsub.f32 %v62, %v147
  %v149 = vand.u32 %v148, 4294901760
  %v150 = vsub.f32 %v148, %v149
  %v151 = vand.u32 %v150, 4294901760
  %152 = vmatmul.f32.gmra.mxu0 %v151
  %v153 = vpop.f32.mrf.mxu0
  %v154 = vadd.f32 %v46, %v153
  %v155 = vand.u32 %v65, 4294901760
  %v156 = vsub.f32 %v65, %v155
  %v157 = vand.u32 %v156, 4294901760
  %v158 = vsub.f32 %v156, %v157
  %v159 = vand.u32 %v158, 4294901760
  %160 = vmatmul.f32.gmra.mxu0 %v159
  %v161 = vpop.f32.mrf.mxu0
  %v162 = vadd.f32 %v46, %v161
  %v163 = vand.u32 %v68, 4294901760
  %v164 = vsub.f32 %v68, %v163
  %v165 = vand.u32 %v164, 4294901760
  %v166 = vsub.f32 %v164, %v165
  %v167 = vand.u32 %v166, 4294901760
  %168 = vmatmul.f32.gmra.mxu0 %v167
  %v169 = vpop.f32.mrf.mxu0
  %v170 = vadd.f32 %v46, %v169
  %v171 = vand.u32 %v71, 4294901760
  %v172 = vsub.f32 %v71, %v171
  %v173 = vand.u32 %v172, 4294901760
  %v174 = vsub.f32 %v172, %v173
  %v175 = vand.u32 %v174, 4294901760
  %176 = vmatmul.f32.gmra.mxu0 %v175
  %v177 = vpop.f32.mrf.mxu0
  %v178 = vadd.f32 %v46, %v177
  %v179 = vand.u32 %v74, 4294901760
  %v180 = vsub.f32 %v74, %v179
  %v181 = vand.u32 %v180, 4294901760
  %v182 = vsub.f32 %v180, %v181
  %v183 = vand.u32 %v182, 4294901760
  %184 = vmatmul.f32.gmra.mxu0 %v183
  %v185 = vpop.f32.mrf.mxu0
  %v186 = vadd.f32 %v46, %v185
  %v187 = vand.u32 %v77, 4294901760
  %v188 = vsub.f32 %v77, %v187
  %v189 = vand.u32 %v188, 4294901760
  %v190 = vsub.f32 %v188, %v189
  %v191 = vand.u32 %v190, 4294901760
  %192 = vmatmul.f32.gmra.mxu0 %v191
  %v193 = vpop.f32.mrf.mxu0
  %v194 = vadd.f32 %v46, %v193
  %v195 = vand.u32 %v80, 4294901760
  %v196 = vsub.f32 %v80, %v195
  %v197 = vand.u32 %v196, 4294901760
  %v198 = vsub.f32 %v196, %v197
  %v199 = vand.u32 %v198, 4294901760
  %200 = vmatmul.f32.gmra.mxu0 %v199
  %v201 = vpop.f32.mrf.mxu0
  %v202 = vadd.f32 %v46, %v201
  %v203 = vand.u32 %v83, 4294901760
  %v204 = vsub.f32 %v83, %v203
  %v205 = vand.u32 %v204, 4294901760
  %v206 = vsub.f32 %v204, %v205
  %v207 = vand.u32 %v206, 4294901760
  %208 = vmatmul.f32.gmra.mxu0 %v207
  %v209 = vpop.f32.mrf.mxu0
  %v210 = vadd.f32 %v46, %v209
  %v211 = vand.u32 %v86, 4294901760
  %v212 = vsub.f32 %v86, %v211
  %v213 = vand.u32 %v212, 4294901760
  %v214 = vsub.f32 %v212, %v213
  %v215 = vand.u32 %v214, 4294901760
  %216 = vmatmul.f32.gmra.mxu0 %v215
  %v217 = vpop.f32.mrf.mxu0
  %v218 = vadd.f32 %v46, %v217
  %v219 = vand.u32 %v89, 4294901760
  %v220 = vsub.f32 %v89, %v219
  %v221 = vand.u32 %v220, 4294901760
  %v222 = vsub.f32 %v220, %v221
  %v223 = vand.u32 %v222, 4294901760
  %224 = vmatmul.f32.gmra.mxu0 %v223
  %v225 = vpop.f32.mrf.mxu0
  %v226 = vadd.f32 %v46, %v225
  %v227 = vand.u32 %v92, 4294901760
  %v228 = vsub.f32 %v92, %v227
  %v229 = vand.u32 %v228, 4294901760
  %v230 = vsub.f32 %v228, %v229
  %v231 = vand.u32 %v230, 4294901760
  %232 = vmatmul.f32.gmra.mxu0 %v231
  %v233 = vpop.f32.mrf.mxu0
  %v234 = vadd.f32 %v46, %v233
  %v235 = vand.u32 %v95, 4294901760
  %v236 = vsub.f32 %v95, %v235
  %v237 = vand.u32 %v236, 4294901760
  %v238 = vsub.f32 %v236, %v237
  %v239 = vand.u32 %v238, 4294901760
  %240 = vmatmul.f32.gmra.mxu0 %v239
  %v241 = vpop.f32.mrf.mxu0
  %v242 = vadd.f32 %v46, %v241
  %243 = vdwg.mxu0
  %244 = vmatpush.msra.mxu0 0.0
  %245 = vmatpush.msra.mxu0 0.0
  %246 = vmatpush.msra.mxu0 0.0
  %247 = vmatpush.msra.mxu0 0.0
  %248 = vmatpush.msra.mxu0 0.0
  %249 = vmatpush.msra.mxu0 0.0
  %250 = vmatpush.msra.mxu0 0.0
  %251 = vmatpush.msra.mxu0 0.0
  %252 = vmatpush.msra.mxu0 0.0
  %253 = vmatpush.msra.mxu0 0.0
  %254 = vmatpush.msra.mxu0 0.0
  %255 = vmatpush.msra.mxu0 0.0
  %256 = vmatpush.msra.mxu0 0.0
  %257 = vmatpush.msra.mxu0 0.0
  %v258 = vand.u32 %v43, 4294901760
  %v259 = vsub.f32 %v43, %v258
  %v260 = vand.u32 %v259, 4294901760
  %v261 = vsub.f32 %v259, %v260
  %v262 = vand.u32 %v261, 4294901760
  %263 = vmatpush.msra.mxu0 %v262
  %v264 = vand.u32 %v42, 4294901760
  %v265 = vsub.f32 %v42, %v264
  %v266 = vand.u32 %v265, 4294901760
  %v267 = vsub.f32 %v265, %v266
  %v268 = vand.u32 %v267, 4294901760
  %269 = vmatpush.msra.mxu0 %v268
  %v270 = vand.u32 %v50, 4294901760
  %271 = vmatmul.f32.gmra.mxu0 %v270
  %v272 = vpop.f32.mrf.mxu0
  %v273 = vadd.f32 %v122, %v272
  %v274 = vand.u32 %v53, 4294901760
  %275 = vmatmul.f32.gmra.mxu0 %v274
  %v276 = vpop.f32.mrf.mxu0
  %v277 = vadd.f32 %v130, %v276
  %v278 = vand.u32 %v56, 4294901760
  %279 = vmatmul.f32.gmra.mxu0 %v278
  %v280 = vpop.f32.mrf.mxu0
  %v281 = vadd.f32 %v138, %v280
  %v282 = vand.u32 %v59, 4294901760
  %283 = vmatmul.f32.gmra.mxu0 %v282
  %v284 = vpop.f32.mrf.mxu0
  %v285 = vadd.f32 %v146, %v284
  %v286 = vand.u32 %v62, 4294901760
  %287 = vmatmul.f32.gmra.mxu0 %v286
  %v288 = vpop.f32.mrf.mxu0
  %v289 = vadd.f32 %v154, %v288
  %v290 = vand.u32 %v65, 4294901760
  %291 = vmatmul.f32.gmra.mxu0 %v290
  %v292 = vpop.f32.mrf.mxu0
  %v293 = vadd.f32 %v162, %v292
  %v294 = vand.u32 %v68, 4294901760
  %295 = vmatmul.f32.gmra.mxu0 %v294
  %v296 = vpop.f32.mrf.mxu0
  %v297 = vadd.f32 %v170, %v296
  %v298 = vand.u32 %v71, 4294901760
  %299 = vmatmul.f32.gmra.mxu0 %v298
  %v300 = vpop.f32.mrf.mxu0
  %v301 = vadd.f32 %v178, %v300
  %v302 = vand.u32 %v74, 4294901760
  %303 = vmatmul.f32.gmra.mxu0 %v302
  %v304 = vpop.f32.mrf.mxu0
  %v305 = vadd.f32 %v186, %v304
  %v306 = vand.u32 %v77, 4294901760
  %307 = vmatmul.f32.gmra.mxu0 %v306
  %v308 = vpop.f32.mrf.mxu0
  %v309 = vadd.f32 %v194, %v308
  %v310 = vand.u32 %v80, 4294901760
  %311 = vmatmul.f32.gmra.mxu0 %v310
  %v312 = vpop.f32.mrf.mxu0
  %v313 = vadd.f32 %v202, %v312
  %v314 = vand.u32 %v83, 4294901760
  %315 = vmatmul.f32.gmra.mxu0 %v314
  %v316 = vpop.f32.mrf.mxu0
  %v317 = vadd.f32 %v210, %v316
  %v318 = vand.u32 %v86, 4294901760
  %319 = vmatmul.f32.gmra.mxu0 %v318
  %v320 = vpop.f32.mrf.mxu0
  %v321 = vadd.f32 %v218, %v320
  %v322 = vand.u32 %v89, 4294901760
  %323 = vmatmul.f32.gmra.mxu0 %v322
  %v324 = vpop.f32.mrf.mxu0
  %v325 = vadd.f32 %v226, %v324
  %v326 = vand.u32 %v92, 4294901760
  %327 = vmatmul.f32.gmra.mxu0 %v326
  %v328 = vpop.f32.mrf.mxu0
  %v329 = vadd.f32 %v234, %v328
  %v330 = vand.u32 %v95, 4294901760
  %331 = vmatmul.f32.gmra.mxu0 %v330
  %v332 = vpop.f32.mrf.mxu0
  %v333 = vadd.f32 %v242, %v332
  %334 = vdwg.mxu0
  %335 = vmatpush.msra.mxu0 0.0
  %336 = vmatpush.msra.mxu0 0.0
  %337 = vmatpush.msra.mxu0 0.0
  %338 = vmatpush.msra.mxu0 0.0
  %339 = vmatpush.msra.mxu0 0.0
  %340 = vmatpush.msra.mxu0 0.0
  %341 = vmatpush.msra.mxu0 0.0
  %342 = vmatpush.msra.mxu0 0.0
  %343 = vmatpush.msra.mxu0 0.0
  %344 = vmatpush.msra.mxu0 0.0
  %345 = vmatpush.msra.mxu0 0.0
  %346 = vmatpush.msra.mxu0 0.0
  %347 = vmatpush.msra.mxu0 0.0
  %348 = vmatpush.msra.mxu0 0.0
  %v349 = vand.u32 %v43, 4294901760
  %v350 = vsub.f32 %v43, %v349
  %351 = vmatpush.msra.mxu0 %v350
  %v352 = vand.u32 %v42, 4294901760
  %v353 = vsub.f32 %v42, %v352
  %354 = vmatpush.msra.mxu0 %v353
  %v355 = vand.u32 %v50, 4294901760
  %v356 = vsub.f32 %v50, %v355
  %357 = vmatmul.f32.gmra.mxu0 %v356
  %v358 = vpop.f32.mrf.mxu0
  %v359 = vadd.f32 %v273, %v358
  %v360 = vand.u32 %v53, 4294901760
  %v361 = vsub.f32 %v53, %v360
  %362 = vmatmul.f32.gmra.mxu0 %v361
  %v363 = vpop.f32.mrf.mxu0
  %v364 = vadd.f32 %v277, %v363
  %v365 = vand.u32 %v56, 4294901760
  %v366 = vsub.f32 %v56, %v365
  %367 = vmatmul.f32.gmra.mxu0 %v366
  %v368 = vpop.f32.mrf.mxu0
  %v369 = vadd.f32 %v281, %v368
  %v370 = vand.u32 %v59, 4294901760
  %v371 = vsub.f32 %v59, %v370
  %372 = vmatmul.f32.gmra.mxu0 %v371
  %v373 = vpop.f32.mrf.mxu0
  %v374 = vadd.f32 %v285, %v373
  %v375 = vand.u32 %v62, 4294901760
  %v376 = vsub.f32 %v62, %v375
  %377 = vmatmul.f32.gmra.mxu0 %v376
  %v378 = vpop.f32.mrf.mxu0
  %v379 = vadd.f32 %v289, %v378
  %v380 = vand.u32 %v65, 4294901760
  %v381 = vsub.f32 %v65, %v380
  %382 = vmatmul.f32.gmra.mxu0 %v381
  %v383 = vpop.f32.mrf.mxu0
  %v384 = vadd.f32 %v293, %v383
  %v385 = vand.u32 %v68, 4294901760
  %v386 = vsub.f32 %v68, %v385
  %387 = vmatmul.f32.gmra.mxu0 %v386
  %v388 = vpop.f32.mrf.mxu0
  %v389 = vadd.f32 %v297, %v388
  %v390 = vand.u32 %v71, 4294901760
  %v391 = vsub.f32 %v71, %v390
  %392 = vmatmul.f32.gmra.mxu0 %v391
  %v393 = vpop.f32.mrf.mxu0
  %v394 = vadd.f32 %v301, %v393
  %v395 = vand.u32 %v74, 4294901760
  %v396 = vsub.f32 %v74, %v395
  %397 = vmatmul.f32.gmra.mxu0 %v396
  %v398 = vpop.f32.mrf.mxu0
  %v399 = vadd.f32 %v305, %v398
  %v400 = vand.u32 %v77, 4294901760
  %v401 = vsub.f32 %v77, %v400
  %402 = vmatmul.f32.gmra.mxu0 %v401
  %v403 = vpop.f32.mrf.mxu0
  %v404 = vadd.f32 %v309, %v403
  %v405 = vand.u32 %v80, 4294901760
  %v406 = vsub.f32 %v80, %v405
  %407 = vmatmul.f32.gmra.mxu0 %v406
  %v408 = vpop.f32.mrf.mxu0
  %v409 = vadd.f32 %v313, %v408
  %v410 = vand.u32 %v83, 4294901760
  %v411 = vsub.f32 %v83, %v410
  %412 = vmatmul.f32.gmra.mxu0 %v411
  %v413 = vpop.f32.mrf.mxu0
  %v414 = vadd.f32 %v317, %v413
  %v415 = vand.u32 %v86, 4294901760
  %v416 = vsub.f32 %v86, %v415
  %417 = vmatmul.f32.gmra.mxu0 %v416
  %v418 = vpop.f32.mrf.mxu0
  %v419 = vadd.f32 %v321, %v418
  %v420 = vand.u32 %v89, 4294901760
  %v421 = vsub.f32 %v89, %v420
  %422 = vmatmul.f32.gmra.mxu0 %v421
  %v423 = vpop.f32.mrf.mxu0
  %v424 = vadd.f32 %v325, %v423
  %v425 = vand.u32 %v92, 4294901760
  %v426 = vsub.f32 %v92, %v425
  %427 = vmatmul.f32.gmra.mxu0 %v426
  %v428 = vpop.f32.mrf.mxu0
  %v429 = vadd.f32 %v329, %v428
  %v430 = vand.u32 %v95, 4294901760
  %v431 = vsub.f32 %v95, %v430
  %432 = vmatmul.f32.gmra.mxu0 %v431
  %v433 = vpop.f32.mrf.mxu0
  %v434 = vadd.f32 %v333, %v433
  %435 = vdwg.mxu0
  %436 = vmatpush.msra.mxu0 0.0
  %437 = vmatpush.msra.mxu0 0.0
  %438 = vmatpush.msra.mxu0 0.0
  %439 = vmatpush.msra.mxu0 0.0
  %440 = vmatpush.msra.mxu0 0.0
  %441 = vmatpush.msra.mxu0 0.0
  %442 = vmatpush.msra.mxu0 0.0
  %443 = vmatpush.msra.mxu0 0.0
  %444 = vmatpush.msra.mxu0 0.0
  %445 = vmatpush.msra.mxu0 0.0
  %446 = vmatpush.msra.mxu0 0.0
  %447 = vmatpush.msra.mxu0 0.0
  %448 = vmatpush.msra.mxu0 0.0
  %449 = vmatpush.msra.mxu0 0.0
  %v450 = vand.u32 %v43, 4294901760
  %451 = vmatpush.msra.mxu0 %v450
  %v452 = vand.u32 %v42, 4294901760
  %453 = vmatpush.msra.mxu0 %v452
  %v454 = vand.u32 %v50, 4294901760
  %v455 = vsub.f32 %v50, %v454
  %v456 = vand.u32 %v455, 4294901760
  %457 = vmatmul.f32.gmra.mxu0 %v456
  %v458 = vpop.f32.mrf.mxu0
  %v459 = vadd.f32 %v359, %v458
  %v460 = vand.u32 %v53, 4294901760
  %v461 = vsub.f32 %v53, %v460
  %v462 = vand.u32 %v461, 4294901760
  %463 = vmatmul.f32.gmra.mxu0 %v462
  %v464 = vpop.f32.mrf.mxu0
  %v465 = vadd.f32 %v364, %v464
  %v466 = vand.u32 %v56, 4294901760
  %v467 = vsub.f32 %v56, %v466
  %v468 = vand.u32 %v467, 4294901760
  %469 = vmatmul.f32.gmra.mxu0 %v468
  %v470 = vpop.f32.mrf.mxu0
  %v471 = vadd.f32 %v369, %v470
  %v472 = vand.u32 %v59, 4294901760
  %v473 = vsub.f32 %v59, %v472
  %v474 = vand.u32 %v473, 4294901760
  %475 = vmatmul.f32.gmra.mxu0 %v474
  %v476 = vpop.f32.mrf.mxu0
  %v477 = vadd.f32 %v374, %v476
  %v478 = vand.u32 %v62, 4294901760
  %v479 = vsub.f32 %v62, %v478
  %v480 = vand.u32 %v479, 4294901760
  %481 = vmatmul.f32.gmra.mxu0 %v480
  %v482 = vpop.f32.mrf.mxu0
  %v483 = vadd.f32 %v379, %v482
  %v484 = vand.u32 %v65, 4294901760
  %v485 = vsub.f32 %v65, %v484
  %v486 = vand.u32 %v485, 4294901760
  %487 = vmatmul.f32.gmra.mxu0 %v486
  %v488 = vpop.f32.mrf.mxu0
  %v489 = vadd.f32 %v384, %v488
  %v490 = vand.u32 %v68, 4294901760
  %v491 = vsub.f32 %v68, %v490
  %v492 = vand.u32 %v491, 4294901760
  %493 = vmatmul.f32.gmra.mxu0 %v492
  %v494 = vpop.f32.mrf.mxu0
  %v495 = vadd.f32 %v389, %v494
  %v496 = vand.u32 %v71, 4294901760
  %v497 = vsub.f32 %v71, %v496
  %v498 = vand.u32 %v497, 4294901760
  %499 = vmatmul.f32.gmra.mxu0 %v498
  %v500 = vpop.f32.mrf.mxu0
  %v501 = vadd.f32 %v394, %v500
  %v502 = vand.u32 %v74, 4294901760
  %v503 = vsub.f32 %v74, %v502
  %v504 = vand.u32 %v503, 4294901760
  %505 = vmatmul.f32.gmra.mxu0 %v504
  %v506 = vpop.f32.mrf.mxu0
  %v507 = vadd.f32 %v399, %v506
  %v508 = vand.u32 %v77, 4294901760
  %v509 = vsub.f32 %v77, %v508
  %v510 = vand.u32 %v509, 4294901760
  %511 = vmatmul.f32.gmra.mxu0 %v510
  %v512 = vpop.f32.mrf.mxu0
  %v513 = vadd.f32 %v404, %v512
  %v514 = vand.u32 %v80, 4294901760
  %v515 = vsub.f32 %v80, %v514
  %v516 = vand.u32 %v515, 4294901760
  %517 = vmatmul.f32.gmra.mxu0 %v516
  %v518 = vpop.f32.mrf.mxu0
  %v519 = vadd.f32 %v409, %v518
  %v520 = vand.u32 %v83, 4294901760
  %v521 = vsub.f32 %v83, %v520
  %v522 = vand.u32 %v521, 4294901760
  %523 = vmatmul.f32.gmra.mxu0 %v522
  %v524 = vpop.f32.mrf.mxu0
  %v525 = vadd.f32 %v414, %v524
  %v526 = vand.u32 %v86, 4294901760
  %v527 = vsub.f32 %v86, %v526
  %v528 = vand.u32 %v527, 4294901760
  %529 = vmatmul.f32.gmra.mxu0 %v528
  %v530 = vpop.f32.mrf.mxu0
  %v531 = vadd.f32 %v419, %v530
  %v532 = vand.u32 %v89, 4294901760
  %v533 = vsub.f32 %v89, %v532
  %v534 = vand.u32 %v533, 4294901760
  %535 = vmatmul.f32.gmra.mxu0 %v534
  %v536 = vpop.f32.mrf.mxu0
  %v537 = vadd.f32 %v424, %v536
  %v538 = vand.u32 %v92, 4294901760
  %v539 = vsub.f32 %v92, %v538
  %v540 = vand.u32 %v539, 4294901760
  %541 = vmatmul.f32.gmra.mxu0 %v540
  %v542 = vpop.f32.mrf.mxu0
  %v543 = vadd.f32 %v429, %v542
  %v544 = vand.u32 %v95, 4294901760
  %v545 = vsub.f32 %v95, %v544
  %v546 = vand.u32 %v545, 4294901760
  %547 = vmatmul.f32.gmra.mxu0 %v546
  %v548 = vpop.f32.mrf.mxu0
  %v549 = vadd.f32 %v434, %v548
  %550 = vdwg.mxu0
  %551 = vmatpush.msra.mxu0 0.0
  %552 = vmatpush.msra.mxu0 0.0
  %553 = vmatpush.msra.mxu0 0.0
  %554 = vmatpush.msra.mxu0 0.0
  %555 = vmatpush.msra.mxu0 0.0
  %556 = vmatpush.msra.mxu0 0.0
  %557 = vmatpush.msra.mxu0 0.0
  %558 = vmatpush.msra.mxu0 0.0
  %559 = vmatpush.msra.mxu0 0.0
  %560 = vmatpush.msra.mxu0 0.0
  %561 = vmatpush.msra.mxu0 0.0
  %562 = vmatpush.msra.mxu0 0.0
  %563 = vmatpush.msra.mxu0 0.0
  %564 = vmatpush.msra.mxu0 0.0
  %v565 = vand.u32 %v43, 4294901760
  %v566 = vsub.f32 %v43, %v565
  %v567 = vand.u32 %v566, 4294901760
  %568 = vmatpush.msra.mxu0 %v567
  %v569 = vand.u32 %v42, 4294901760
  %v570 = vsub.f32 %v42, %v569
  %v571 = vand.u32 %v570, 4294901760
  %572 = vmatpush.msra.mxu0 %v571
  %v573 = vand.u32 %v50, 4294901760
  %574 = vmatmul.f32.gmra.mxu0 %v573
  %v575 = vpop.f32.mrf.mxu0
  %v576 = vadd.f32 %v459, %v575
  %v577 = vand.u32 %v53, 4294901760
  %578 = vmatmul.f32.gmra.mxu0 %v577
  %v579 = vpop.f32.mrf.mxu0
  %v580 = vadd.f32 %v465, %v579
  %v581 = vand.u32 %v56, 4294901760
  %582 = vmatmul.f32.gmra.mxu0 %v581
  %v583 = vpop.f32.mrf.mxu0
  %v584 = vadd.f32 %v471, %v583
  %v585 = vand.u32 %v59, 4294901760
  %586 = vmatmul.f32.gmra.mxu0 %v585
  %v587 = vpop.f32.mrf.mxu0
  %v588 = vadd.f32 %v477, %v587
  %v589 = vand.u32 %v62, 4294901760
  %590 = vmatmul.f32.gmra.mxu0 %v589
  %v591 = vpop.f32.mrf.mxu0
  %v592 = vadd.f32 %v483, %v591
  %v593 = vand.u32 %v65, 4294901760
  %594 = vmatmul.f32.gmra.mxu0 %v593
  %v595 = vpop.f32.mrf.mxu0
  %v596 = vadd.f32 %v489, %v595
  %v597 = vand.u32 %v68, 4294901760
  %598 = vmatmul.f32.gmra.mxu0 %v597
  %v599 = vpop.f32.mrf.mxu0
  %v600 = vadd.f32 %v495, %v599
  %v601 = vand.u32 %v71, 4294901760
  %602 = vmatmul.f32.gmra.mxu0 %v601
  %v603 = vpop.f32.mrf.mxu0
  %v604 = vadd.f32 %v501, %v603
  %v605 = vand.u32 %v74, 4294901760
  %606 = vmatmul.f32.gmra.mxu0 %v605
  %v607 = vpop.f32.mrf.mxu0
  %v608 = vadd.f32 %v507, %v607
  %v609 = vand.u32 %v77, 4294901760
  %610 = vmatmul.f32.gmra.mxu0 %v609
  %v611 = vpop.f32.mrf.mxu0
  %v612 = vadd.f32 %v513, %v611
  %v613 = vand.u32 %v80, 4294901760
  %614 = vmatmul.f32.gmra.mxu0 %v613
  %v615 = vpop.f32.mrf.mxu0
  %v616 = vadd.f32 %v519, %v615
  %v617 = vand.u32 %v83, 4294901760
  %618 = vmatmul.f32.gmra.mxu0 %v617
  %v619 = vpop.f32.mrf.mxu0
  %v620 = vadd.f32 %v525, %v619
  %v621 = vand.u32 %v86, 4294901760
  %622 = vmatmul.f32.gmra.mxu0 %v621
  %v623 = vpop.f32.mrf.mxu0
  %v624 = vadd.f32 %v531, %v623
  %v625 = vand.u32 %v89, 4294901760
  %626 = vmatmul.f32.gmra.mxu0 %v625
  %v627 = vpop.f32.mrf.mxu0
  %v628 = vadd.f32 %v537, %v627
  %v629 = vand.u32 %v92, 4294901760
  %630 = vmatmul.f32.gmra.mxu0 %v629
  %v631 = vpop.f32.mrf.mxu0
  %v632 = vadd.f32 %v543, %v631
  %v633 = vand.u32 %v95, 4294901760
  %634 = vmatmul.f32.gmra.mxu0 %v633
  %v635 = vpop.f32.mrf.mxu0
  %v636 = vadd.f32 %v549, %v635
  %637 = vdwg.mxu0
  %638 = vmatpush.msra.mxu0 0.0
  %639 = vmatpush.msra.mxu0 0.0
  %640 = vmatpush.msra.mxu0 0.0
  %641 = vmatpush.msra.mxu0 0.0
  %642 = vmatpush.msra.mxu0 0.0
  %643 = vmatpush.msra.mxu0 0.0
  %644 = vmatpush.msra.mxu0 0.0
  %645 = vmatpush.msra.mxu0 0.0
  %646 = vmatpush.msra.mxu0 0.0
  %647 = vmatpush.msra.mxu0 0.0
  %648 = vmatpush.msra.mxu0 0.0
  %649 = vmatpush.msra.mxu0 0.0
  %650 = vmatpush.msra.mxu0 0.0
  %651 = vmatpush.msra.mxu0 0.0
  %v652 = vand.u32 %v43, 4294901760
  %653 = vmatpush.msra.mxu0 %v652
  %v654 = vand.u32 %v42, 4294901760
  %655 = vmatpush.msra.mxu0 %v654
  %v656 = vand.u32 %v50, 4294901760
  %657 = vmatmul.f32.gmra.mxu0 %v656
  %v658 = vpop.f32.mrf.mxu0
  %v659 = vadd.f32 %v576, %v658
  %v660 = vand.u32 %v53, 4294901760
  %661 = vmatmul.f32.gmra.mxu0 %v660
  %v662 = vpop.f32.mrf.mxu0
  %v663 = vadd.f32 %v580, %v662
  %v664 = vand.u32 %v56, 4294901760
  %665 = vmatmul.f32.gmra.mxu0 %v664
  %v666 = vpop.f32.mrf.mxu0
  %v667 = vadd.f32 %v584, %v666
  %v668 = vand.u32 %v59, 4294901760
  %669 = vmatmul.f32.gmra.mxu0 %v668
  %v670 = vpop.f32.mrf.mxu0
  %v671 = vadd.f32 %v588, %v670
  %v672 = vand.u32 %v62, 4294901760
  %673 = vmatmul.f32.gmra.mxu0 %v672
  %v674 = vpop.f32.mrf.mxu0
  %v675 = vadd.f32 %v592, %v674
  %v676 = vand.u32 %v65, 4294901760
  %677 = vmatmul.f32.gmra.mxu0 %v676
  %v678 = vpop.f32.mrf.mxu0
  %v679 = vadd.f32 %v596, %v678
  %v680 = vand.u32 %v68, 4294901760
  %681 = vmatmul.f32.gmra.mxu0 %v680
  %v682 = vpop.f32.mrf.mxu0
  %v683 = vadd.f32 %v600, %v682
  %v684 = vand.u32 %v71, 4294901760
  %685 = vmatmul.f32.gmra.mxu0 %v684
  %v686 = vpop.f32.mrf.mxu0
  %v687 = vadd.f32 %v604, %v686
  %v688 = vand.u32 %v74, 4294901760
  %689 = vmatmul.f32.gmra.mxu0 %v688
  %v690 = vpop.f32.mrf.mxu0
  %v691 = vadd.f32 %v608, %v690
  %v692 = vand.u32 %v77, 4294901760
  %693 = vmatmul.f32.gmra.mxu0 %v692
  %v694 = vpop.f32.mrf.mxu0
  %v695 = vadd.f32 %v612, %v694
  %v696 = vand.u32 %v80, 4294901760
  %697 = vmatmul.f32.gmra.mxu0 %v696
  %v698 = vpop.f32.mrf.mxu0
  %v699 = vadd.f32 %v616, %v698
  %v700 = vand.u32 %v83, 4294901760
  %701 = vmatmul.f32.gmra.mxu0 %v700
  %v702 = vpop.f32.mrf.mxu0
  %v703 = vadd.f32 %v620, %v702
  %v704 = vand.u32 %v86, 4294901760
  %705 = vmatmul.f32.gmra.mxu0 %v704
  %v706 = vpop.f32.mrf.mxu0
  %v707 = vadd.f32 %v624, %v706
  %v708 = vand.u32 %v89, 4294901760
  %709 = vmatmul.f32.gmra.mxu0 %v708
  %v710 = vpop.f32.mrf.mxu0
  %v711 = vadd.f32 %v628, %v710
  %v712 = vand.u32 %v92, 4294901760
  %713 = vmatmul.f32.gmra.mxu0 %v712
  %v714 = vpop.f32.mrf.mxu0
  %v715 = vadd.f32 %v632, %v714
  %v716 = vand.u32 %v95, 4294901760
  %717 = vmatmul.f32.gmra.mxu0 %v716
  %v718 = vpop.f32.mrf.mxu0
  %v719 = vadd.f32 %v636, %v718
  %720 = vdwg.mxu0
  %v721 = vmax.f32 %v659, 0.0
  %v722 = vmax.f32 %v663, 0.0
  %v723 = vmax.f32 %v667, 0.0
  %v724 = vmax.f32 %v671, 0.0
  %v725 = vmax.f32 %v675, 0.0
  %v726 = vmax.f32 %v679, 0.0
  %v727 = vmax.f32 %v683, 0.0
  %v728 = vmax.f32 %v687, 0.0
  %v729 = vmax.f32 %v691, 0.0
  %v730 = vmax.f32 %v695, 0.0
  %v731 = vmax.f32 %v699, 0.0
  %v732 = vmax.f32 %v703, 0.0
  %v733 = vmax.f32 %v707, 0.0
  %v734 = vmax.f32 %v711, 0.0
  %v735 = vmax.f32 %v715, 0.0
  %v736 = vmax.f32 %v719, 0.0
  %v737 = vld [vmem:[%s3] sm:$0xff]
  %v738 = vld [vmem:[%s3 + $0x8] sm:$0xff]
  %v739 = vld [vmem:[%s3 + $0x10] sm:$0xff]
  %v740 = vld [vmem:[%s3 + $0x18] sm:$0xff]
  %v741 = vld [vmem:[%s3 + $0x20] sm:$0xff]
  %v742 = vld [vmem:[%s3 + $0x28] sm:$0xff]
  %v743 = vld [vmem:[%s3 + $0x30] sm:$0xff]
  %v744 = vld [vmem:[%s3 + $0x38] sm:$0xff]
  %v745 = vld [vmem:[%s3 + $0x40] sm:$0xff]
  %v746 = vld [vmem:[%s3 + $0x48] sm:$0xff]
  %v747 = vld [vmem:[%s3 + $0x50] sm:$0xff]
  %v748 = vld [vmem:[%s3 + $0x58] sm:$0xff]
  %v749 = vld [vmem:[%s3 + $0x60] sm:$0xff]
  %v750 = vld [vmem:[%s3 + $0x68] sm:$0xff]
  %v751 = vld [vmem:[%s3 + $0x70] sm:$0xff]
  %v752 = vld [vmem:[%s3 + $0x78] sm:$0xff]
  %v753 = vld [vmem:[%s4] sm:$0x1]
  %v755 = vperm.slane %v753, 0
  %v757 = vand.u32 %v752, 4294901760
  %758 = vmatpush.msra.mxu0 %v757
  %v759 = vand.u32 %v751, 4294901760
  %760 = vmatpush.msra.mxu0 %v759
  %v761 = vand.u32 %v750, 4294901760
  %762 = vmatpush.msra.mxu0 %v761
  %v763 = vand.u32 %v749, 4294901760
  %764 = vmatpush.msra.mxu0 %v763
  %v765 = vand.u32 %v748, 4294901760
  %766 = vmatpush.msra.mxu0 %v765
  %v767 = vand.u32 %v747, 4294901760
  %768 = vmatpush.msra.mxu0 %v767
  %v769 = vand.u32 %v746, 4294901760
  %770 = vmatpush.msra.mxu0 %v769
  %v771 = vand.u32 %v745, 4294901760
  %772 = vmatpush.msra.mxu0 %v771
  %v773 = vand.u32 %v744, 4294901760
  %774 = vmatpush.msra.mxu0 %v773
  %v775 = vand.u32 %v743, 4294901760
  %776 = vmatpush.msra.mxu0 %v775
  %v777 = vand.u32 %v742, 4294901760
  %778 = vmatpush.msra.mxu0 %v777
  %v779 = vand.u32 %v741, 4294901760
  %780 = vmatpush.msra.mxu0 %v779
  %v781 = vand.u32 %v740, 4294901760
  %782 = vmatpush.msra.mxu0 %v781
  %v783 = vand.u32 %v739, 4294901760
  %784 = vmatpush.msra.mxu0 %v783
  %v785 = vand.u32 %v738, 4294901760
  %786 = vmatpush.msra.mxu0 %v785
  %v787 = vand.u32 %v737, 4294901760
  %788 = vmatpush.msra.mxu0 %v787
  %v789 = vand.u32 %v721, 4294901760
  %v790 = vsub.f32 %v721, %v789
  %v791 = vand.u32 %v790, 4294901760
  %v792 = vsub.f32 %v790, %v791
  %v793 = vand.u32 %v792, 4294901760
  %794 = vmatmul.f32.gmra.mxu0 %v793
  %v795 = vpop.f32.mrf.mxu0
  %v796 = vadd.f32 %v755, %v795
  %v797 = vand.u32 %v722, 4294901760
  %v798 = vsub.f32 %v722, %v797
  %v799 = vand.u32 %v798, 4294901760
  %v800 = vsub.f32 %v798, %v799
  %v801 = vand.u32 %v800, 4294901760
  %802 = vmatmul.f32.gmra.mxu0 %v801
  %v803 = vpop.f32.mrf.mxu0
  %v804 = vadd.f32 %v755, %v803
  %v805 = vand.u32 %v723, 4294901760
  %v806 = vsub.f32 %v723, %v805
  %v807 = vand.u32 %v806, 4294901760
  %v808 = vsub.f32 %v806, %v807
  %v809 = vand.u32 %v808, 4294901760
  %810 = vmatmul.f32.gmra.mxu0 %v809
  %v811 = vpop.f32.mrf.mxu0
  %v812 = vadd.f32 %v755, %v811
  %v813 = vand.u32 %v724, 4294901760
  %v814 = vsub.f32 %v724, %v813
  %v815 = vand.u32 %v814, 4294901760
  %v816 = vsub.f32 %v814, %v815
  %v817 = vand.u32 %v816, 4294901760
  %818 = vmatmul.f32.gmra.mxu0 %v817
  %v819 = vpop.f32.mrf.mxu0
  %v820 = vadd.f32 %v755, %v819
  %v821 = vand.u32 %v725, 4294901760
  %v822 = vsub.f32 %v725, %v821
  %v823 = vand.u32 %v822, 4294901760
  %v824 = vsub.f32 %v822, %v823
  %v825 = vand.u32 %v824, 4294901760
  %826 = vmatmul.f32.gmra.mxu0 %v825
  %v827 = vpop.f32.mrf.mxu0
  %v828 = vadd.f32 %v755, %v827
  %v829 = vand.u32 %v726, 4294901760
  %v830 = vsub.f32 %v726, %v829
  %v831 = vand.u32 %v830, 4294901760
  %v832 = vsub.f32 %v830, %v831
  %v833 = vand.u32 %v832, 4294901760
  %834 = vmatmul.f32.gmra.mxu0 %v833
  %v835 = vpop.f32.mrf.mxu0
  %v836 = vadd.f32 %v755, %v835
  %v837 = vand.u32 %v727, 4294901760
  %v838 = vsub.f32 %v727, %v837
  %v839 = vand.u32 %v838, 4294901760
  %v840 = vsub.f32 %v838, %v839
  %v841 = vand.u32 %v840, 4294901760
  %842 = vmatmul.f32.gmra.mxu0 %v841
  %v843 = vpop.f32.mrf.mxu0
  %v844 = vadd.f32 %v755, %v843
  %v845 = vand.u32 %v728, 4294901760
  %v846 = vsub.f32 %v728, %v845
  %v847 = vand.u32 %v846, 4294901760
  %v848 = vsub.f32 %v846, %v847
  %v849 = vand.u32 %v848, 4294901760
  %850 = vmatmul.f32.gmra.mxu0 %v849
  %v851 = vpop.f32.mrf.mxu0
  %v852 = vadd.f32 %v755, %v851
  %v853 = vand.u32 %v729, 4294901760
  %v854 = vsub.f32 %v729, %v853
  %v855 = vand.u32 %v854, 4294901760
  %v856 = vsub.f32 %v854, %v855
  %v857 = vand.u32 %v856, 4294901760
  %858 = vmatmul.f32.gmra.mxu0 %v857
  %v859 = vpop.f32.mrf.mxu0
  %v860 = vadd.f32 %v755, %v859
  %v861 = vand.u32 %v730, 4294901760
  %v862 = vsub.f32 %v730, %v861
  %v863 = vand.u32 %v862, 4294901760
  %v864 = vsub.f32 %v862, %v863
  %v865 = vand.u32 %v864, 4294901760
  %866 = vmatmul.f32.gmra.mxu0 %v865
  %v867 = vpop.f32.mrf.mxu0
  %v868 = vadd.f32 %v755, %v867
  %v869 = vand.u32 %v731, 4294901760
  %v870 = vsub.f32 %v731, %v869
  %v871 = vand.u32 %v870, 4294901760
  %v872 = vsub.f32 %v870, %v871
  %v873 = vand.u32 %v872, 4294901760
  %874 = vmatmul.f32.gmra.mxu0 %v873
  %v875 = vpop.f32.mrf.mxu0
  %v876 = vadd.f32 %v755, %v875
  %v877 = vand.u32 %v732, 4294901760
  %v878 = vsub.f32 %v732, %v877
  %v879 = vand.u32 %v878, 4294901760
  %v880 = vsub.f32 %v878, %v879
  %v881 = vand.u32 %v880, 4294901760
  %882 = vmatmul.f32.gmra.mxu0 %v881
  %v883 = vpop.f32.mrf.mxu0
  %v884 = vadd.f32 %v755, %v883
  %v885 = vand.u32 %v733, 4294901760
  %v886 = vsub.f32 %v733, %v885
  %v887 = vand.u32 %v886, 4294901760
  %v888 = vsub.f32 %v886, %v887
  %v889 = vand.u32 %v888, 4294901760
  %890 = vmatmul.f32.gmra.mxu0 %v889
  %v891 = vpop.f32.mrf.mxu0
  %v892 = vadd.f32 %v755, %v891
  %v893 = vand.u32 %v734, 4294901760
  %v894 = vsub.f32 %v734, %v893
  %v895 = vand.u32 %v894, 4294901760
  %v896 = vsub.f32 %v894, %v895
  %v897 = vand.u32 %v896, 4294901760
  %898 = vmatmul.f32.gmra.mxu0 %v897
  %v899 = vpop.f32.mrf.mxu0
  %v900 = vadd.f32 %v755, %v899
  %v901 = vand.u32 %v735, 4294901760
  %v902 = vsub.f32 %v735, %v901
  %v903 = vand.u32 %v902, 4294901760
  %v904 = vsub.f32 %v902, %v903
  %v905 = vand.u32 %v904, 4294901760
  %906 = vmatmul.f32.gmra.mxu0 %v905
  %v907 = vpop.f32.mrf.mxu0
  %v908 = vadd.f32 %v755, %v907
  %v909 = vand.u32 %v736, 4294901760
  %v910 = vsub.f32 %v736, %v909
  %v911 = vand.u32 %v910, 4294901760
  %v912 = vsub.f32 %v910, %v911
  %v913 = vand.u32 %v912, 4294901760
  %914 = vmatmul.f32.gmra.mxu0 %v913
  %v915 = vpop.f32.mrf.mxu0
  %v916 = vadd.f32 %v755, %v915
  %917 = vdwg.mxu0
  %v918 = vand.u32 %v752, 4294901760
  %v919 = vsub.f32 %v752, %v918
  %v920 = vand.u32 %v919, 4294901760
  %v921 = vsub.f32 %v919, %v920
  %v922 = vand.u32 %v921, 4294901760
  %923 = vmatpush.msra.mxu0 %v922
  %v924 = vand.u32 %v751, 4294901760
  %v925 = vsub.f32 %v751, %v924
  %v926 = vand.u32 %v925, 4294901760
  %v927 = vsub.f32 %v925, %v926
  %v928 = vand.u32 %v927, 4294901760
  %929 = vmatpush.msra.mxu0 %v928
  %v930 = vand.u32 %v750, 4294901760
  %v931 = vsub.f32 %v750, %v930
  %v932 = vand.u32 %v931, 4294901760
  %v933 = vsub.f32 %v931, %v932
  %v934 = vand.u32 %v933, 4294901760
  %935 = vmatpush.msra.mxu0 %v934
  %v936 = vand.u32 %v749, 4294901760
  %v937 = vsub.f32 %v749, %v936
  %v938 = vand.u32 %v937, 4294901760
  %v939 = vsub.f32 %v937, %v938
  %v940 = vand.u32 %v939, 4294901760
  %941 = vmatpush.msra.mxu0 %v940
  %v942 = vand.u32 %v748, 4294901760
  %v943 = vsub.f32 %v748, %v942
  %v944 = vand.u32 %v943, 4294901760
  %v945 = vsub.f32 %v943, %v944
  %v946 = vand.u32 %v945, 4294901760
  %947 = vmatpush.msra.mxu0 %v946
  %v948 = vand.u32 %v747, 4294901760
  %v949 = vsub.f32 %v747, %v948
  %v950 = vand.u32 %v949, 4294901760
  %v951 = vsub.f32 %v949, %v950
  %v952 = vand.u32 %v951, 4294901760
  %953 = vmatpush.msra.mxu0 %v952
  %v954 = vand.u32 %v746, 4294901760
  %v955 = vsub.f32 %v746, %v954
  %v956 = vand.u32 %v955, 4294901760
  %v957 = vsub.f32 %v955, %v956
  %v958 = vand.u32 %v957, 4294901760
  %959 = vmatpush.msra.mxu0 %v958
  %v960 = vand.u32 %v745, 4294901760
  %v961 = vsub.f32 %v745, %v960
  %v962 = vand.u32 %v961, 4294901760
  %v963 = vsub.f32 %v961, %v962
  %v964 = vand.u32 %v963, 4294901760
  %965 = vmatpush.msra.mxu0 %v964
  %v966 = vand.u32 %v744, 4294901760
  %v967 = vsub.f32 %v744, %v966
  %v968 = vand.u32 %v967, 4294901760
  %v969 = vsub.f32 %v967, %v968
  %v970 = vand.u32 %v969, 4294901760
  %971 = vmatpush.msra.mxu0 %v970
  %v972 = vand.u32 %v743, 4294901760
  %v973 = vsub.f32 %v743, %v972
  %v974 = vand.u32 %v973, 4294901760
  %v975 = vsub.f32 %v973, %v974
  %v976 = vand.u32 %v975, 4294901760
  %977 = vmatpush.msra.mxu0 %v976
  %v978 = vand.u32 %v742, 4294901760
  %v979 = vsub.f32 %v742, %v978
  %v980 = vand.u32 %v979, 4294901760
  %v981 = vsub.f32 %v979, %v980
  %v982 = vand.u32 %v981, 4294901760
  %983 = vmatpush.msra.mxu0 %v982
  %v984 = vand.u32 %v741, 4294901760
  %v985 = vsub.f32 %v741, %v984
  %v986 = vand.u32 %v985, 4294901760
  %v987 = vsub.f32 %v985, %v986
  %v988 = vand.u32 %v987, 4294901760
  %989 = vmatpush.msra.mxu0 %v988
  %v990 = vand.u32 %v740, 4294901760
  %v991 = vsub.f32 %v740, %v990
  %v992 = vand.u32 %v991, 4294901760
  %v993 = vsub.f32 %v991, %v992
  %v994 = vand.u32 %v993, 4294901760
  %995 = vmatpush.msra.mxu0 %v994
  %v996 = vand.u32 %v739, 4294901760
  %v997 = vsub.f32 %v739, %v996
  %v998 = vand.u32 %v997, 4294901760
  %v999 = vsub.f32 %v997, %v998
  %v1000 = vand.u32 %v999, 4294901760
  %1001 = vmatpush.msra.mxu0 %v1000
  %v1002 = vand.u32 %v738, 4294901760
  %v1003 = vsub.f32 %v738, %v1002
  %v1004 = vand.u32 %v1003, 4294901760
  %v1005 = vsub.f32 %v1003, %v1004
  %v1006 = vand.u32 %v1005, 4294901760
  %1007 = vmatpush.msra.mxu0 %v1006
  %v1008 = vand.u32 %v737, 4294901760
  %v1009 = vsub.f32 %v737, %v1008
  %v1010 = vand.u32 %v1009, 4294901760
  %v1011 = vsub.f32 %v1009, %v1010
  %v1012 = vand.u32 %v1011, 4294901760
  %1013 = vmatpush.msra.mxu0 %v1012
  %v1014 = vand.u32 %v721, 4294901760
  %1015 = vmatmul.f32.gmra.mxu0 %v1014
  %v1016 = vpop.f32.mrf.mxu0
  %v1017 = vadd.f32 %v796, %v1016
  %v1018 = vand.u32 %v722, 4294901760
  %1019 = vmatmul.f32.gmra.mxu0 %v1018
  %v1020 = vpop.f32.mrf.mxu0
  %v1021 = vadd.f32 %v804, %v1020
  %v1022 = vand.u32 %v723, 4294901760
  %1023 = vmatmul.f32.gmra.mxu0 %v1022
  %v1024 = vpop.f32.mrf.mxu0
  %v1025 = vadd.f32 %v812, %v1024
  %v1026 = vand.u32 %v724, 4294901760
  %1027 = vmatmul.f32.gmra.mxu0 %v1026
  %v1028 = vpop.f32.mrf.mxu0
  %v1029 = vadd.f32 %v820, %v1028
  %v1030 = vand.u32 %v725, 4294901760
  %1031 = vmatmul.f32.gmra.mxu0 %v1030
  %v1032 = vpop.f32.mrf.mxu0
  %v1033 = vadd.f32 %v828, %v1032
  %v1034 = vand.u32 %v726, 4294901760
  %1035 = vmatmul.f32.gmra.mxu0 %v1034
  %v1036 = vpop.f32.mrf.mxu0
  %v1037 = vadd.f32 %v836, %v1036
  %v1038 = vand.u32 %v727, 4294901760
  %1039 = vmatmul.f32.gmra.mxu0 %v1038
  %v1040 = vpop.f32.mrf.mxu0
  %v1041 = vadd.f32 %v844, %v1040
  %v1042 = vand.u32 %v728, 4294901760
  %1043 = vmatmul.f32.gmra.mxu0 %v1042
  %v1044 = vpop.f32.mrf.mxu0
  %v1045 = vadd.f32 %v852, %v1044
  %v1046 = vand.u32 %v729, 4294901760
  %1047 = vmatmul.f32.gmra.mxu0 %v1046
  %v1048 = vpop.f32.mrf.mxu0
  %v1049 = vadd.f32 %v860, %v1048
  %v1050 = vand.u32 %v730, 4294901760
  %1051 = vmatmul.f32.gmra.mxu0 %v1050
  %v1052 = vpop.f32.mrf.mxu0
  %v1053 = vadd.f32 %v868, %v1052
  %v1054 = vand.u32 %v731, 4294901760
  %1055 = vmatmul.f32.gmra.mxu0 %v1054
  %v1056 = vpop.f32.mrf.mxu0
  %v1057 = vadd.f32 %v876, %v1056
  %v1058 = vand.u32 %v732, 4294901760
  %1059 = vmatmul.f32.gmra.mxu0 %v1058
  %v1060 = vpop.f32.mrf.mxu0
  %v1061 = vadd.f32 %v884, %v1060
  %v1062 = vand.u32 %v733, 4294901760
  %1063 = vmatmul.f32.gmra.mxu0 %v1062
  %v1064 = vpop.f32.mrf.mxu0
  %v1065 = vadd.f32 %v892, %v1064
  %v1066 = vand.u32 %v734, 4294901760
  %1067 = vmatmul.f32.gmra.mxu0 %v1066
  %v1068 = vpop.f32.mrf.mxu0
  %v1069 = vadd.f32 %v900, %v1068
  %v1070 = vand.u32 %v735, 4294901760
  %1071 = vmatmul.f32.gmra.mxu0 %v1070
  %v1072 = vpop.f32.mrf.mxu0
  %v1073 = vadd.f32 %v908, %v1072
  %v1074 = vand.u32 %v736, 4294901760
  %1075 = vmatmul.f32.gmra.mxu0 %v1074
  %v1076 = vpop.f32.mrf.mxu0
  %v1077 = vadd.f32 %v916, %v1076
  %1078 = vdwg.mxu0
  %v1079 = vand.u32 %v752, 4294901760
  %v1080 = vsub.f32 %v752, %v1079
  %1081 = vmatpush.msra.mxu0 %v1080
  %v1082 = vand.u32 %v751, 4294901760
  %v1083 = vsub.f32 %v751, %v1082
  %1084 = vmatpush.msra.mxu0 %v1083
  %v1085 = vand.u32 %v750, 4294901760
  %v1086 = vsub.f32 %v750, %v1085
  %1087 = vmatpush.msra.mxu0 %v1086
  %v1088 = vand.u32 %v749, 4294901760
  %v1089 = vsub.f32 %v749, %v1088
  %1090 = vmatpush.msra.mxu0 %v1089
  %v1091 = vand.u32 %v748, 4294901760
  %v1092 = vsub.f32 %v748, %v1091
  %1093 = vmatpush.msra.mxu0 %v1092
  %v1094 = vand.u32 %v747, 4294901760
  %v1095 = vsub.f32 %v747, %v1094
  %1096 = vmatpush.msra.mxu0 %v1095
  %v1097 = vand.u32 %v746, 4294901760
  %v1098 = vsub.f32 %v746, %v1097
  %1099 = vmatpush.msra.mxu0 %v1098
  %v1100 = vand.u32 %v745, 4294901760
  %v1101 = vsub.f32 %v745, %v1100
  %1102 = vmatpush.msra.mxu0 %v1101
  %v1103 = vand.u32 %v744, 4294901760
  %v1104 = vsub.f32 %v744, %v1103
  %1105 = vmatpush.msra.mxu0 %v1104
  %v1106 = vand.u32 %v743, 4294901760
  %v1107 = vsub.f32 %v743, %v1106
  %1108 = vmatpush.msra.mxu0 %v1107
  %v1109 = vand.u32 %v742, 4294901760
  %v1110 = vsub.f32 %v742, %v1109
  %1111 = vmatpush.msra.mxu0 %v1110
  %v1112 = vand.u32 %v741, 4294901760
  %v1113 = vsub.f32 %v741, %v1112
  %1114 = vmatpush.msra.mxu0 %v1113
  %v1115 = vand.u32 %v740, 4294901760
  %v1116 = vsub.f32 %v740, %v1115
  %1117 = vmatpush.msra.mxu0 %v1116
  %v1118 = vand.u32 %v739, 4294901760
  %v1119 = vsub.f32 %v739, %v1118
  %1120 = vmatpush.msra.mxu0 %v1119
  %v1121 = vand.u32 %v738, 4294901760
  %v1122 = vsub.f32 %v738, %v1121
  %1123 = vmatpush.msra.mxu0 %v1122
  %v1124 = vand.u32 %v737, 4294901760
  %v1125 = vsub.f32 %v737, %v1124
  %1126 = vmatpush.msra.mxu0 %v1125
  %v1127 = vand.u32 %v721, 4294901760
  %v1128 = vsub.f32 %v721, %v1127
  %1129 = vmatmul.f32.gmra.mxu0 %v1128
  %v1130 = vpop.f32.mrf.mxu0
  %v1131 = vadd.f32 %v1017, %v1130
  %v1132 = vand.u32 %v722, 4294901760
  %v1133 = vsub.f32 %v722, %v1132
  %1134 = vmatmul.f32.gmra.mxu0 %v1133
  %v1135 = vpop.f32.mrf.mxu0
  %v1136 = vadd.f32 %v1021, %v1135
  %v1137 = vand.u32 %v723, 4294901760
  %v1138 = vsub.f32 %v723, %v1137
  %1139 = vmatmul.f32.gmra.mxu0 %v1138
  %v1140 = vpop.f32.mrf.mxu0
  %v1141 = vadd.f32 %v1025, %v1140
  %v1142 = vand.u32 %v724, 4294901760
  %v1143 = vsub.f32 %v724, %v1142
  %1144 = vmatmul.f32.gmra.mxu0 %v1143
  %v1145 = vpop.f32.mrf.mxu0
  %v1146 = vadd.f32 %v1029, %v1145
  %v1147 = vand.u32 %v725, 4294901760
  %v1148 = vsub.f32 %v725, %v1147
  %1149 = vmatmul.f32.gmra.mxu0 %v1148
  %v1150 = vpop.f32.mrf.mxu0
  %v1151 = vadd.f32 %v1033, %v1150
  %v1152 = vand.u32 %v726, 4294901760
  %v1153 = vsub.f32 %v726, %v1152
  %1154 = vmatmul.f32.gmra.mxu0 %v1153
  %v1155 = vpop.f32.mrf.mxu0
  %v1156 = vadd.f32 %v1037, %v1155
  %v1157 = vand.u32 %v727, 4294901760
  %v1158 = vsub.f32 %v727, %v1157
  %1159 = vmatmul.f32.gmra.mxu0 %v1158
  %v1160 = vpop.f32.mrf.mxu0
  %v1161 = vadd.f32 %v1041, %v1160
  %v1162 = vand.u32 %v728, 4294901760
  %v1163 = vsub.f32 %v728, %v1162
  %1164 = vmatmul.f32.gmra.mxu0 %v1163
  %v1165 = vpop.f32.mrf.mxu0
  %v1166 = vadd.f32 %v1045, %v1165
  %v1167 = vand.u32 %v729, 4294901760
  %v1168 = vsub.f32 %v729, %v1167
  %1169 = vmatmul.f32.gmra.mxu0 %v1168
  %v1170 = vpop.f32.mrf.mxu0
  %v1171 = vadd.f32 %v1049, %v1170
  %v1172 = vand.u32 %v730, 4294901760
  %v1173 = vsub.f32 %v730, %v1172
  %1174 = vmatmul.f32.gmra.mxu0 %v1173
  %v1175 = vpop.f32.mrf.mxu0
  %v1176 = vadd.f32 %v1053, %v1175
  %v1177 = vand.u32 %v731, 4294901760
  %v1178 = vsub.f32 %v731, %v1177
  %1179 = vmatmul.f32.gmra.mxu0 %v1178
  %v1180 = vpop.f32.mrf.mxu0
  %v1181 = vadd.f32 %v1057, %v1180
  %v1182 = vand.u32 %v732, 4294901760
  %v1183 = vsub.f32 %v732, %v1182
  %1184 = vmatmul.f32.gmra.mxu0 %v1183
  %v1185 = vpop.f32.mrf.mxu0
  %v1186 = vadd.f32 %v1061, %v1185
  %v1187 = vand.u32 %v733, 4294901760
  %v1188 = vsub.f32 %v733, %v1187
  %1189 = vmatmul.f32.gmra.mxu0 %v1188
  %v1190 = vpop.f32.mrf.mxu0
  %v1191 = vadd.f32 %v1065, %v1190
  %v1192 = vand.u32 %v734, 4294901760
  %v1193 = vsub.f32 %v734, %v1192
  %1194 = vmatmul.f32.gmra.mxu0 %v1193
  %v1195 = vpop.f32.mrf.mxu0
  %v1196 = vadd.f32 %v1069, %v1195
  %v1197 = vand.u32 %v735, 4294901760
  %v1198 = vsub.f32 %v735, %v1197
  %1199 = vmatmul.f32.gmra.mxu0 %v1198
  %v1200 = vpop.f32.mrf.mxu0
  %v1201 = vadd.f32 %v1073, %v1200
  %v1202 = vand.u32 %v736, 4294901760
  %v1203 = vsub.f32 %v736, %v1202
  %1204 = vmatmul.f32.gmra.mxu0 %v1203
  %v1205 = vpop.f32.mrf.mxu0
  %v1206 = vadd.f32 %v1077, %v1205
  %1207 = vdwg.mxu0
  %v1208 = vand.u32 %v752, 4294901760
  %1209 = vmatpush.msra.mxu0 %v1208
  %v1210 = vand.u32 %v751, 4294901760
  %1211 = vmatpush.msra.mxu0 %v1210
  %v1212 = vand.u32 %v750, 4294901760
  %1213 = vmatpush.msra.mxu0 %v1212
  %v1214 = vand.u32 %v749, 4294901760
  %1215 = vmatpush.msra.mxu0 %v1214
  %v1216 = vand.u32 %v748, 4294901760
  %1217 = vmatpush.msra.mxu0 %v1216
  %v1218 = vand.u32 %v747, 4294901760
  %1219 = vmatpush.msra.mxu0 %v1218
  %v1220 = vand.u32 %v746, 4294901760
  %1221 = vmatpush.msra.mxu0 %v1220
  %v1222 = vand.u32 %v745, 4294901760
  %1223 = vmatpush.msra.mxu0 %v1222
  %v1224 = vand.u32 %v744, 4294901760
  %1225 = vmatpush.msra.mxu0 %v1224
  %v1226 = vand.u32 %v743, 4294901760
  %1227 = vmatpush.msra.mxu0 %v1226
  %v1228 = vand.u32 %v742, 4294901760
  %1229 = vmatpush.msra.mxu0 %v1228
  %v1230 = vand.u32 %v741, 4294901760
  %1231 = vmatpush.msra.mxu0 %v1230
  %v1232 = vand.u32 %v740, 4294901760
  %1233 = vmatpush.msra.mxu0 %v1232
  %v1234 = vand.u32 %v739, 4294901760
  %1235 = vmatpush.msra.mxu0 %v1234
  %v1236 = vand.u32 %v738, 4294901760
  %1237 = vmatpush.msra.mxu0 %v1236
  %v1238 = vand.u32 %v737, 4294901760
  %1239 = vmatpush.msra.mxu0 %v1238
  %v1240 = vand.u32 %v721, 4294901760
  %v1241 = vsub.f32 %v721, %v1240
  %v1242 = vand.u32 %v1241, 4294901760
  %1243 = vmatmul.f32.gmra.mxu0 %v1242
  %v1244 = vpop.f32.mrf.mxu0
  %v1245 = vadd.f32 %v1131, %v1244
  %v1246 = vand.u32 %v722, 4294901760
  %v1247 = vsub.f32 %v722, %v1246
  %v1248 = vand.u32 %v1247, 4294901760
  %1249 = vmatmul.f32.gmra.mxu0 %v1248
  %v1250 = vpop.f32.mrf.mxu0
  %v1251 = vadd.f32 %v1136, %v1250
  %v1252 = vand.u32 %v723, 4294901760
  %v1253 = vsub.f32 %v723, %v1252
  %v1254 = vand.u32 %v1253, 4294901760
  %1255 = vmatmul.f32.gmra.mxu0 %v1254
  %v1256 = vpop.f32.mrf.mxu0
  %v1257 = vadd.f32 %v1141, %v1256
  %v1258 = vand.u32 %v724, 4294901760
  %v1259 = vsub.f32 %v724, %v1258
  %v1260 = vand.u32 %v1259, 4294901760
  %1261 = vmatmul.f32.gmra.mxu0 %v1260
  %v1262 = vpop.f32.mrf.mxu0
  %v1263 = vadd.f32 %v1146, %v1262
  %v1264 = vand.u32 %v725, 4294901760
  %v1265 = vsub.f32 %v725, %v1264
  %v1266 = vand.u32 %v1265, 4294901760
  %1267 = vmatmul.f32.gmra.mxu0 %v1266
  %v1268 = vpop.f32.mrf.mxu0
  %v1269 = vadd.f32 %v1151, %v1268
  %v1270 = vand.u32 %v726, 4294901760
  %v1271 = vsub.f32 %v726, %v1270
  %v1272 = vand.u32 %v1271, 4294901760
  %1273 = vmatmul.f32.gmra.mxu0 %v1272
  %v1274 = vpop.f32.mrf.mxu0
  %v1275 = vadd.f32 %v1156, %v1274
  %v1276 = vand.u32 %v727, 4294901760
  %v1277 = vsub.f32 %v727, %v1276
  %v1278 = vand.u32 %v1277, 4294901760
  %1279 = vmatmul.f32.gmra.mxu0 %v1278
  %v1280 = vpop.f32.mrf.mxu0
  %v1281 = vadd.f32 %v1161, %v1280
  %v1282 = vand.u32 %v728, 4294901760
  %v1283 = vsub.f32 %v728, %v1282
  %v1284 = vand.u32 %v1283, 4294901760
  %1285 = vmatmul.f32.gmra.mxu0 %v1284
  %v1286 = vpop.f32.mrf.mxu0
  %v1287 = vadd.f32 %v1166, %v1286
  %v1288 = vand.u32 %v729, 4294901760
  %v1289 = vsub.f32 %v729, %v1288
  %v1290 = vand.u32 %v1289, 4294901760
  %1291 = vmatmul.f32.gmra.mxu0 %v1290
  %v1292 = vpop.f32.mrf.mxu0
  %v1293 = vadd.f32 %v1171, %v1292
  %v1294 = vand.u32 %v730, 4294901760
  %v1295 = vsub.f32 %v730, %v1294
  %v1296 = vand.u32 %v1295, 4294901760
  %1297 = vmatmul.f32.gmra.mxu0 %v1296
  %v1298 = vpop.f32.mrf.mxu0
  %v1299 = vadd.f32 %v1176, %v1298
  %v1300 = vand.u32 %v731, 4294901760
  %v1301 = vsub.f32 %v731, %v1300
  %v1302 = vand.u32 %v1301, 4294901760
  %1303 = vmatmul.f32.gmra.mxu0 %v1302
  %v1304 = vpop.f32.mrf.mxu0
  %v1305 = vadd.f32 %v1181, %v1304
  %v1306 = vand.u32 %v732, 4294901760
  %v1307 = vsub.f32 %v732, %v1306
  %v1308 = vand.u32 %v1307, 4294901760
  %1309 = vmatmul.f32.gmra.mxu0 %v1308
  %v1310 = vpop.f32.mrf.mxu0
  %v1311 = vadd.f32 %v1186, %v1310
  %v1312 = vand.u32 %v733, 4294901760
  %v1313 = vsub.f32 %v733, %v1312
  %v1314 = vand.u32 %v1313, 4294901760
  %1315 = vmatmul.f32.gmra.mxu0 %v1314
  %v1316 = vpop.f32.mrf.mxu0
  %v1317 = vadd.f32 %v1191, %v1316
  %v1318 = vand.u32 %v734, 4294901760
  %v1319 = vsub.f32 %v734, %v1318
  %v1320 = vand.u32 %v1319, 4294901760
  %1321 = vmatmul.f32.gmra.mxu0 %v1320
  %v1322 = vpop.f32.mrf.mxu0
  %v1323 = vadd.f32 %v1196, %v1322
  %v1324 = vand.u32 %v735, 4294901760
  %v1325 = vsub.f32 %v735, %v1324
  %v1326 = vand.u32 %v1325, 4294901760
  %1327 = vmatmul.f32.gmra.mxu0 %v1326
  %v1328 = vpop.f32.mrf.mxu0
  %v1329 = vadd.f32 %v1201, %v1328
  %v1330 = vand.u32 %v736, 4294901760
  %v1331 = vsub.f32 %v736, %v1330
  %v1332 = vand.u32 %v1331, 4294901760
  %1333 = vmatmul.f32.gmra.mxu0 %v1332
  %v1334 = vpop.f32.mrf.mxu0
  %v1335 = vadd.f32 %v1206, %v1334
  %1336 = vdwg.mxu0
  %v1337 = vand.u32 %v752, 4294901760
  %v1338 = vsub.f32 %v752, %v1337
  %v1339 = vand.u32 %v1338, 4294901760
  %1340 = vmatpush.msra.mxu0 %v1339
  %v1341 = vand.u32 %v751, 4294901760
  %v1342 = vsub.f32 %v751, %v1341
  %v1343 = vand.u32 %v1342, 4294901760
  %1344 = vmatpush.msra.mxu0 %v1343
  %v1345 = vand.u32 %v750, 4294901760
  %v1346 = vsub.f32 %v750, %v1345
  %v1347 = vand.u32 %v1346, 4294901760
  %1348 = vmatpush.msra.mxu0 %v1347
  %v1349 = vand.u32 %v749, 4294901760
  %v1350 = vsub.f32 %v749, %v1349
  %v1351 = vand.u32 %v1350, 4294901760
  %1352 = vmatpush.msra.mxu0 %v1351
  %v1353 = vand.u32 %v748, 4294901760
  %v1354 = vsub.f32 %v748, %v1353
  %v1355 = vand.u32 %v1354, 4294901760
  %1356 = vmatpush.msra.mxu0 %v1355
  %v1357 = vand.u32 %v747, 4294901760
  %v1358 = vsub.f32 %v747, %v1357
  %v1359 = vand.u32 %v1358, 4294901760
  %1360 = vmatpush.msra.mxu0 %v1359
  %v1361 = vand.u32 %v746, 4294901760
  %v1362 = vsub.f32 %v746, %v1361
  %v1363 = vand.u32 %v1362, 4294901760
  %1364 = vmatpush.msra.mxu0 %v1363
  %v1365 = vand.u32 %v745, 4294901760
  %v1366 = vsub.f32 %v745, %v1365
  %v1367 = vand.u32 %v1366, 4294901760
  %1368 = vmatpush.msra.mxu0 %v1367
  %v1369 = vand.u32 %v744, 4294901760
  %v1370 = vsub.f32 %v744, %v1369
  %v1371 = vand.u32 %v1370, 4294901760
  %1372 = vmatpush.msra.mxu0 %v1371
  %v1373 = vand.u32 %v743, 4294901760
  %v1374 = vsub.f32 %v743, %v1373
  %v1375 = vand.u32 %v1374, 4294901760
  %1376 = vmatpush.msra.mxu0 %v1375
  %v1377 = vand.u32 %v742, 4294901760
  %v1378 = vsub.f32 %v742, %v1377
  %v1379 = vand.u32 %v1378, 4294901760
  %1380 = vmatpush.msra.mxu0 %v1379
  %v1381 = vand.u32 %v741, 4294901760
  %v1382 = vsub.f32 %v741, %v1381
  %v1383 = vand.u32 %v1382, 4294901760
  %1384 = vmatpush.msra.mxu0 %v1383
  %v1385 = vand.u32 %v740, 4294901760
  %v1386 = vsub.f32 %v740, %v1385
  %v1387 = vand.u32 %v1386, 4294901760
  %1388 = vmatpush.msra.mxu0 %v1387
  %v1389 = vand.u32 %v739, 4294901760
  %v1390 = vsub.f32 %v739, %v1389
  %v1391 = vand.u32 %v1390, 4294901760
  %1392 = vmatpush.msra.mxu0 %v1391
  %v1393 = vand.u32 %v738, 4294901760
  %v1394 = vsub.f32 %v738, %v1393
  %v1395 = vand.u32 %v1394, 4294901760
  %1396 = vmatpush.msra.mxu0 %v1395
  %v1397 = vand.u32 %v737, 4294901760
  %v1398 = vsub.f32 %v737, %v1397
  %v1399 = vand.u32 %v1398, 4294901760
  %1400 = vmatpush.msra.mxu0 %v1399
  %v1401 = vand.u32 %v721, 4294901760
  %1402 = vmatmul.f32.gmra.mxu0 %v1401
  %v1403 = vpop.f32.mrf.mxu0
  %v1404 = vadd.f32 %v1245, %v1403
  %v1405 = vand.u32 %v722, 4294901760
  %1406 = vmatmul.f32.gmra.mxu0 %v1405
  %v1407 = vpop.f32.mrf.mxu0
  %v1408 = vadd.f32 %v1251, %v1407
  %v1409 = vand.u32 %v723, 4294901760
  %1410 = vmatmul.f32.gmra.mxu0 %v1409
  %v1411 = vpop.f32.mrf.mxu0
  %v1412 = vadd.f32 %v1257, %v1411
  %v1413 = vand.u32 %v724, 4294901760
  %1414 = vmatmul.f32.gmra.mxu0 %v1413
  %v1415 = vpop.f32.mrf.mxu0
  %v1416 = vadd.f32 %v1263, %v1415
  %v1417 = vand.u32 %v725, 4294901760
  %1418 = vmatmul.f32.gmra.mxu0 %v1417
  %v1419 = vpop.f32.mrf.mxu0
  %v1420 = vadd.f32 %v1269, %v1419
  %v1421 = vand.u32 %v726, 4294901760
  %1422 = vmatmul.f32.gmra.mxu0 %v1421
  %v1423 = vpop.f32.mrf.mxu0
  %v1424 = vadd.f32 %v1275, %v1423
  %v1425 = vand.u32 %v727, 4294901760
  %1426 = vmatmul.f32.gmra.mxu0 %v1425
  %v1427 = vpop.f32.mrf.mxu0
  %v1428 = vadd.f32 %v1281, %v1427
  %v1429 = vand.u32 %v728, 4294901760
  %1430 = vmatmul.f32.gmra.mxu0 %v1429
  %v1431 = vpop.f32.mrf.mxu0
  %v1432 = vadd.f32 %v1287, %v1431
  %v1433 = vand.u32 %v729, 4294901760
  %1434 = vmatmul.f32.gmra.mxu0 %v1433
  %v1435 = vpop.f32.mrf.mxu0
  %v1436 = vadd.f32 %v1293, %v1435
  %v1437 = vand.u32 %v730, 4294901760
  %1438 = vmatmul.f32.gmra.mxu0 %v1437
  %v1439 = vpop.f32.mrf.mxu0
  %v1440 = vadd.f32 %v1299, %v1439
  %v1441 = vand.u32 %v731, 4294901760
  %1442 = vmatmul.f32.gmra.mxu0 %v1441
  %v1443 = vpop.f32.mrf.mxu0
  %v1444 = vadd.f32 %v1305, %v1443
  %v1445 = vand.u32 %v732, 4294901760
  %1446 = vmatmul.f32.gmra.mxu0 %v1445
  %v1447 = vpop.f32.mrf.mxu0
  %v1448 = vadd.f32 %v1311, %v1447
  %v1449 = vand.u32 %v733, 4294901760
  %1450 = vmatmul.f32.gmra.mxu0 %v1449
  %v1451 = vpop.f32.mrf.mxu0
  %v1452 = vadd.f32 %v1317, %v1451
  %v1453 = vand.u32 %v734, 4294901760
  %1454 = vmatmul.f32.gmra.mxu0 %v1453
  %v1455 = vpop.f32.mrf.mxu0
  %v1456 = vadd.f32 %v1323, %v1455
  %v1457 = vand.u32 %v735, 4294901760
  %1458 = vmatmul.f32.gmra.mxu0 %v1457
  %v1459 = vpop.f32.mrf.mxu0
  %v1460 = vadd.f32 %v1329, %v1459
  %v1461 = vand.u32 %v736, 4294901760
  %1462 = vmatmul.f32.gmra.mxu0 %v1461
  %v1463 = vpop.f32.mrf.mxu0
  %v1464 = vadd.f32 %v1335, %v1463
  %1465 = vdwg.mxu0
  %v1466 = vand.u32 %v752, 4294901760
  %1467 = vmatpush.msra.mxu0 %v1466
  %v1468 = vand.u32 %v751, 4294901760
  %1469 = vmatpush.msra.mxu0 %v1468
  %v1470 = vand.u32 %v750, 4294901760
  %1471 = vmatpush.msra.mxu0 %v1470
  %v1472 = vand.u32 %v749, 4294901760
  %1473 = vmatpush.msra.mxu0 %v1472
  %v1474 = vand.u32 %v748, 4294901760
  %1475 = vmatpush.msra.mxu0 %v1474
  %v1476 = vand.u32 %v747, 4294901760
  %1477 = vmatpush.msra.mxu0 %v1476
  %v1478 = vand.u32 %v746, 4294901760
  %1479 = vmatpush.msra.mxu0 %v1478
  %v1480 = vand.u32 %v745, 4294901760
  %1481 = vmatpush.msra.mxu0 %v1480
  %v1482 = vand.u32 %v744, 4294901760
  %1483 = vmatpush.msra.mxu0 %v1482
  %v1484 = vand.u32 %v743, 4294901760
  %1485 = vmatpush.msra.mxu0 %v1484
  %v1486 = vand.u32 %v742, 4294901760
  %1487 = vmatpush.msra.mxu0 %v1486
  %v1488 = vand.u32 %v741, 4294901760
  %1489 = vmatpush.msra.mxu0 %v1488
  %v1490 = vand.u32 %v740, 4294901760
  %1491 = vmatpush.msra.mxu0 %v1490
  %v1492 = vand.u32 %v739, 4294901760
  %1493 = vmatpush.msra.mxu0 %v1492
  %v1494 = vand.u32 %v738, 4294901760
  %1495 = vmatpush.msra.mxu0 %v1494
  %v1496 = vand.u32 %v737, 4294901760
  %1497 = vmatpush.msra.mxu0 %v1496
  %v1498 = vand.u32 %v721, 4294901760
  %1499 = vmatmul.f32.gmra.mxu0 %v1498
  %v1500 = vpop.f32.mrf.mxu0
  %v1501 = vadd.f32 %v1404, %v1500
  %v1502 = vand.u32 %v722, 4294901760
  %1503 = vmatmul.f32.gmra.mxu0 %v1502
  %v1504 = vpop.f32.mrf.mxu0
  %v1505 = vadd.f32 %v1408, %v1504
  %v1506 = vand.u32 %v723, 4294901760
  %1507 = vmatmul.f32.gmra.mxu0 %v1506
  %v1508 = vpop.f32.mrf.mxu0
  %v1509 = vadd.f32 %v1412, %v1508
  %v1510 = vand.u32 %v724, 4294901760
  %1511 = vmatmul.f32.gmra.mxu0 %v1510
  %v1512 = vpop.f32.mrf.mxu0
  %v1513 = vadd.f32 %v1416, %v1512
  %v1514 = vand.u32 %v725, 4294901760
  %1515 = vmatmul.f32.gmra.mxu0 %v1514
  %v1516 = vpop.f32.mrf.mxu0
  %v1517 = vadd.f32 %v1420, %v1516
  %v1518 = vand.u32 %v726, 4294901760
  %1519 = vmatmul.f32.gmra.mxu0 %v1518
  %v1520 = vpop.f32.mrf.mxu0
  %v1521 = vadd.f32 %v1424, %v1520
  %v1522 = vand.u32 %v727, 4294901760
  %1523 = vmatmul.f32.gmra.mxu0 %v1522
  %v1524 = vpop.f32.mrf.mxu0
  %v1525 = vadd.f32 %v1428, %v1524
  %v1526 = vand.u32 %v728, 4294901760
  %1527 = vmatmul.f32.gmra.mxu0 %v1526
  %v1528 = vpop.f32.mrf.mxu0
  %v1529 = vadd.f32 %v1432, %v1528
  %v1530 = vand.u32 %v729, 4294901760
  %1531 = vmatmul.f32.gmra.mxu0 %v1530
  %v1532 = vpop.f32.mrf.mxu0
  %v1533 = vadd.f32 %v1436, %v1532
  %v1534 = vand.u32 %v730, 4294901760
  %1535 = vmatmul.f32.gmra.mxu0 %v1534
  %v1536 = vpop.f32.mrf.mxu0
  %v1537 = vadd.f32 %v1440, %v1536
  %v1538 = vand.u32 %v731, 4294901760
  %1539 = vmatmul.f32.gmra.mxu0 %v1538
  %v1540 = vpop.f32.mrf.mxu0
  %v1541 = vadd.f32 %v1444, %v1540
  %v1542 = vand.u32 %v732, 4294901760
  %1543 = vmatmul.f32.gmra.mxu0 %v1542
  %v1544 = vpop.f32.mrf.mxu0
  %v1545 = vadd.f32 %v1448, %v1544
  %v1546 = vand.u32 %v733, 4294901760
  %1547 = vmatmul.f32.gmra.mxu0 %v1546
  %v1548 = vpop.f32.mrf.mxu0
  %v1549 = vadd.f32 %v1452, %v1548
  %v1550 = vand.u32 %v734, 4294901760
  %1551 = vmatmul.f32.gmra.mxu0 %v1550
  %v1552 = vpop.f32.mrf.mxu0
  %v1553 = vadd.f32 %v1456, %v1552
  %v1554 = vand.u32 %v735, 4294901760
  %1555 = vmatmul.f32.gmra.mxu0 %v1554
  %v1556 = vpop.f32.mrf.mxu0
  %v1557 = vadd.f32 %v1460, %v1556
  %v1558 = vand.u32 %v736, 4294901760
  %1559 = vmatmul.f32.gmra.mxu0 %v1558
  %v1560 = vpop.f32.mrf.mxu0
  %v1561 = vadd.f32 %v1464, %v1560
  %1562 = vdwg.mxu0
  %v1563 = vmax.f32 %v1501, 0.0
  %v1564 = vmax.f32 %v1505, 0.0
  %v1565 = vmax.f32 %v1509, 0.0
  %v1566 = vmax.f32 %v1513, 0.0
  %v1567 = vmax.f32 %v1517, 0.0
  %v1568 = vmax.f32 %v1521, 0.0
  %v1569 = vmax.f32 %v1525, 0.0
  %v1570 = vmax.f32 %v1529, 0.0
  %v1571 = vmax.f32 %v1533, 0.0
  %v1572 = vmax.f32 %v1537, 0.0
  %v1573 = vmax.f32 %v1541, 0.0
  %v1574 = vmax.f32 %v1545, 0.0
  %v1575 = vmax.f32 %v1549, 0.0
  %v1576 = vmax.f32 %v1553, 0.0
  %v1577 = vmax.f32 %v1557, 0.0
  %v1578 = vmax.f32 %v1561, 0.0
  %v1579 = vld [vmem:[%s5] sm:$0xff]
  %v1580 = vld [vmem:[%s5 + $0x8] sm:$0xff]
  %v1581 = vld [vmem:[%s5 + $0x10] sm:$0xff]
  %v1582 = vld [vmem:[%s5 + $0x18] sm:$0xff]
  %v1583 = vld [vmem:[%s5 + $0x20] sm:$0xff]
  %v1584 = vld [vmem:[%s5 + $0x28] sm:$0xff]
  %v1585 = vld [vmem:[%s5 + $0x30] sm:$0xff]
  %v1586 = vld [vmem:[%s5 + $0x38] sm:$0xff]
  %v1587 = vld [vmem:[%s5 + $0x40] sm:$0xff]
  %v1588 = vld [vmem:[%s5 + $0x48] sm:$0xff]
  %v1589 = vld [vmem:[%s5 + $0x50] sm:$0xff]
  %v1590 = vld [vmem:[%s5 + $0x58] sm:$0xff]
  %v1591 = vld [vmem:[%s5 + $0x60] sm:$0xff]
  %v1592 = vld [vmem:[%s5 + $0x68] sm:$0xff]
  %v1593 = vld [vmem:[%s5 + $0x70] sm:$0xff]
  %v1594 = vld [vmem:[%s5 + $0x78] sm:$0xff]
  %v1595 = vld [vmem:[%s6] sm:$0x1]
  %v1597 = vperm.slane %v1595, 0
  %v1599 = vand.u32 %v1594, 4294901760
  %1600 = vmatpush.msra.mxu0 %v1599
  %v1601 = vand.u32 %v1593, 4294901760
  %1602 = vmatpush.msra.mxu0 %v1601
  %v1603 = vand.u32 %v1592, 4294901760
  %1604 = vmatpush.msra.mxu0 %v1603
  %v1605 = vand.u32 %v1591, 4294901760
  %1606 = vmatpush.msra.mxu0 %v1605
  %v1607 = vand.u32 %v1590, 4294901760
  %1608 = vmatpush.msra.mxu0 %v1607
  %v1609 = vand.u32 %v1589, 4294901760
  %1610 = vmatpush.msra.mxu0 %v1609
  %v1611 = vand.u32 %v1588, 4294901760
  %1612 = vmatpush.msra.mxu0 %v1611
  %v1613 = vand.u32 %v1587, 4294901760
  %1614 = vmatpush.msra.mxu0 %v1613
  %v1615 = vand.u32 %v1586, 4294901760
  %1616 = vmatpush.msra.mxu0 %v1615
  %v1617 = vand.u32 %v1585, 4294901760
  %1618 = vmatpush.msra.mxu0 %v1617
  %v1619 = vand.u32 %v1584, 4294901760
  %1620 = vmatpush.msra.mxu0 %v1619
  %v1621 = vand.u32 %v1583, 4294901760
  %1622 = vmatpush.msra.mxu0 %v1621
  %v1623 = vand.u32 %v1582, 4294901760
  %1624 = vmatpush.msra.mxu0 %v1623
  %v1625 = vand.u32 %v1581, 4294901760
  %1626 = vmatpush.msra.mxu0 %v1625
  %v1627 = vand.u32 %v1580, 4294901760
  %1628 = vmatpush.msra.mxu0 %v1627
  %v1629 = vand.u32 %v1579, 4294901760
  %1630 = vmatpush.msra.mxu0 %v1629
  %v1631 = vand.u32 %v1563, 4294901760
  %v1632 = vsub.f32 %v1563, %v1631
  %v1633 = vand.u32 %v1632, 4294901760
  %v1634 = vsub.f32 %v1632, %v1633
  %v1635 = vand.u32 %v1634, 4294901760
  %1636 = vmatmul.f32.gmra.mxu0 %v1635
  %v1637 = vpop.f32.mrf.mxu0
  %v1638 = vadd.f32 %v1597, %v1637
  %v1639 = vand.u32 %v1564, 4294901760
  %v1640 = vsub.f32 %v1564, %v1639
  %v1641 = vand.u32 %v1640, 4294901760
  %v1642 = vsub.f32 %v1640, %v1641
  %v1643 = vand.u32 %v1642, 4294901760
  %1644 = vmatmul.f32.gmra.mxu0 %v1643
  %v1645 = vpop.f32.mrf.mxu0
  %v1646 = vadd.f32 %v1597, %v1645
  %v1647 = vand.u32 %v1565, 4294901760
  %v1648 = vsub.f32 %v1565, %v1647
  %v1649 = vand.u32 %v1648, 4294901760
  %v1650 = vsub.f32 %v1648, %v1649
  %v1651 = vand.u32 %v1650, 4294901760
  %1652 = vmatmul.f32.gmra.mxu0 %v1651
  %v1653 = vpop.f32.mrf.mxu0
  %v1654 = vadd.f32 %v1597, %v1653
  %v1655 = vand.u32 %v1566, 4294901760
  %v1656 = vsub.f32 %v1566, %v1655
  %v1657 = vand.u32 %v1656, 4294901760
  %v1658 = vsub.f32 %v1656, %v1657
  %v1659 = vand.u32 %v1658, 4294901760
  %1660 = vmatmul.f32.gmra.mxu0 %v1659
  %v1661 = vpop.f32.mrf.mxu0
  %v1662 = vadd.f32 %v1597, %v1661
  %v1663 = vand.u32 %v1567, 4294901760
  %v1664 = vsub.f32 %v1567, %v1663
  %v1665 = vand.u32 %v1664, 4294901760
  %v1666 = vsub.f32 %v1664, %v1665
  %v1667 = vand.u32 %v1666, 4294901760
  %1668 = vmatmul.f32.gmra.mxu0 %v1667
  %v1669 = vpop.f32.mrf.mxu0
  %v1670 = vadd.f32 %v1597, %v1669
  %v1671 = vand.u32 %v1568, 4294901760
  %v1672 = vsub.f32 %v1568, %v1671
  %v1673 = vand.u32 %v1672, 4294901760
  %v1674 = vsub.f32 %v1672, %v1673
  %v1675 = vand.u32 %v1674, 4294901760
  %1676 = vmatmul.f32.gmra.mxu0 %v1675
  %v1677 = vpop.f32.mrf.mxu0
  %v1678 = vadd.f32 %v1597, %v1677
  %v1679 = vand.u32 %v1569, 4294901760
  %v1680 = vsub.f32 %v1569, %v1679
  %v1681 = vand.u32 %v1680, 4294901760
  %v1682 = vsub.f32 %v1680, %v1681
  %v1683 = vand.u32 %v1682, 4294901760
  %1684 = vmatmul.f32.gmra.mxu0 %v1683
  %v1685 = vpop.f32.mrf.mxu0
  %v1686 = vadd.f32 %v1597, %v1685
  %v1687 = vand.u32 %v1570, 4294901760
  %v1688 = vsub.f32 %v1570, %v1687
  %v1689 = vand.u32 %v1688, 4294901760
  %v1690 = vsub.f32 %v1688, %v1689
  %v1691 = vand.u32 %v1690, 4294901760
  %1692 = vmatmul.f32.gmra.mxu0 %v1691
  %v1693 = vpop.f32.mrf.mxu0
  %v1694 = vadd.f32 %v1597, %v1693
  %v1695 = vand.u32 %v1571, 4294901760
  %v1696 = vsub.f32 %v1571, %v1695
  %v1697 = vand.u32 %v1696, 4294901760
  %v1698 = vsub.f32 %v1696, %v1697
  %v1699 = vand.u32 %v1698, 4294901760
  %1700 = vmatmul.f32.gmra.mxu0 %v1699
  %v1701 = vpop.f32.mrf.mxu0
  %v1702 = vadd.f32 %v1597, %v1701
  %v1703 = vand.u32 %v1572, 4294901760
  %v1704 = vsub.f32 %v1572, %v1703
  %v1705 = vand.u32 %v1704, 4294901760
  %v1706 = vsub.f32 %v1704, %v1705
  %v1707 = vand.u32 %v1706, 4294901760
  %1708 = vmatmul.f32.gmra.mxu0 %v1707
  %v1709 = vpop.f32.mrf.mxu0
  %v1710 = vadd.f32 %v1597, %v1709
  %v1711 = vand.u32 %v1573, 4294901760
  %v1712 = vsub.f32 %v1573, %v1711
  %v1713 = vand.u32 %v1712, 4294901760
  %v1714 = vsub.f32 %v1712, %v1713
  %v1715 = vand.u32 %v1714, 4294901760
  %1716 = vmatmul.f32.gmra.mxu0 %v1715
  %v1717 = vpop.f32.mrf.mxu0
  %v1718 = vadd.f32 %v1597, %v1717
  %v1719 = vand.u32 %v1574, 4294901760
  %v1720 = vsub.f32 %v1574, %v1719
  %v1721 = vand.u32 %v1720, 4294901760
  %v1722 = vsub.f32 %v1720, %v1721
  %v1723 = vand.u32 %v1722, 4294901760
  %1724 = vmatmul.f32.gmra.mxu0 %v1723
  %v1725 = vpop.f32.mrf.mxu0
  %v1726 = vadd.f32 %v1597, %v1725
  %v1727 = vand.u32 %v1575, 4294901760
  %v1728 = vsub.f32 %v1575, %v1727
  %v1729 = vand.u32 %v1728, 4294901760
  %v1730 = vsub.f32 %v1728, %v1729
  %v1731 = vand.u32 %v1730, 4294901760
  %1732 = vmatmul.f32.gmra.mxu0 %v1731
  %v1733 = vpop.f32.mrf.mxu0
  %v1734 = vadd.f32 %v1597, %v1733
  %v1735 = vand.u32 %v1576, 4294901760
  %v1736 = vsub.f32 %v1576, %v1735
  %v1737 = vand.u32 %v1736, 4294901760
  %v1738 = vsub.f32 %v1736, %v1737
  %v1739 = vand.u32 %v1738, 4294901760
  %1740 = vmatmul.f32.gmra.mxu0 %v1739
  %v1741 = vpop.f32.mrf.mxu0
  %v1742 = vadd.f32 %v1597, %v1741
  %v1743 = vand.u32 %v1577, 4294901760
  %v1744 = vsub.f32 %v1577, %v1743
  %v1745 = vand.u32 %v1744, 4294901760
  %v1746 = vsub.f32 %v1744, %v1745
  %v1747 = vand.u32 %v1746, 4294901760
  %1748 = vmatmul.f32.gmra.mxu0 %v1747
  %v1749 = vpop.f32.mrf.mxu0
  %v1750 = vadd.f32 %v1597, %v1749
  %v1751 = vand.u32 %v1578, 4294901760
  %v1752 = vsub.f32 %v1578, %v1751
  %v1753 = vand.u32 %v1752, 4294901760
  %v1754 = vsub.f32 %v1752, %v1753
  %v1755 = vand.u32 %v1754, 4294901760
  %1756 = vmatmul.f32.gmra.mxu0 %v1755
  %v1757 = vpop.f32.mrf.mxu0
  %v1758 = vadd.f32 %v1597, %v1757
  %1759 = vdwg.mxu0
  %v1760 = vand.u32 %v1594, 4294901760
  %v1761 = vsub.f32 %v1594, %v1760
  %v1762 = vand.u32 %v1761, 4294901760
  %v1763 = vsub.f32 %v1761, %v1762
  %v1764 = vand.u32 %v1763, 4294901760
  %1765 = vmatpush.msra.mxu0 %v1764
  %v1766 = vand.u32 %v1593, 4294901760
  %v1767 = vsub.f32 %v1593, %v1766
  %v1768 = vand.u32 %v1767, 4294901760
  %v1769 = vsub.f32 %v1767, %v1768
  %v1770 = vand.u32 %v1769, 4294901760
  %1771 = vmatpush.msra.mxu0 %v1770
  %v1772 = vand.u32 %v1592, 4294901760
  %v1773 = vsub.f32 %v1592, %v1772
  %v1774 = vand.u32 %v1773, 4294901760
  %v1775 = vsub.f32 %v1773, %v1774
  %v1776 = vand.u32 %v1775, 4294901760
  %1777 = vmatpush.msra.mxu0 %v1776
  %v1778 = vand.u32 %v1591, 4294901760
  %v1779 = vsub.f32 %v1591, %v1778
  %v1780 = vand.u32 %v1779, 4294901760
  %v1781 = vsub.f32 %v1779, %v1780
  %v1782 = vand.u32 %v1781, 4294901760
  %1783 = vmatpush.msra.mxu0 %v1782
  %v1784 = vand.u32 %v1590, 4294901760
  %v1785 = vsub.f32 %v1590, %v1784
  %v1786 = vand.u32 %v1785, 4294901760
  %v1787 = vsub.f32 %v1785, %v1786
  %v1788 = vand.u32 %v1787, 4294901760
  %1789 = vmatpush.msra.mxu0 %v1788
  %v1790 = vand.u32 %v1589, 4294901760
  %v1791 = vsub.f32 %v1589, %v1790
  %v1792 = vand.u32 %v1791, 4294901760
  %v1793 = vsub.f32 %v1791, %v1792
  %v1794 = vand.u32 %v1793, 4294901760
  %1795 = vmatpush.msra.mxu0 %v1794
  %v1796 = vand.u32 %v1588, 4294901760
  %v1797 = vsub.f32 %v1588, %v1796
  %v1798 = vand.u32 %v1797, 4294901760
  %v1799 = vsub.f32 %v1797, %v1798
  %v1800 = vand.u32 %v1799, 4294901760
  %1801 = vmatpush.msra.mxu0 %v1800
  %v1802 = vand.u32 %v1587, 4294901760
  %v1803 = vsub.f32 %v1587, %v1802
  %v1804 = vand.u32 %v1803, 4294901760
  %v1805 = vsub.f32 %v1803, %v1804
  %v1806 = vand.u32 %v1805, 4294901760
  %1807 = vmatpush.msra.mxu0 %v1806
  %v1808 = vand.u32 %v1586, 4294901760
  %v1809 = vsub.f32 %v1586, %v1808
  %v1810 = vand.u32 %v1809, 4294901760
  %v1811 = vsub.f32 %v1809, %v1810
  %v1812 = vand.u32 %v1811, 4294901760
  %1813 = vmatpush.msra.mxu0 %v1812
  %v1814 = vand.u32 %v1585, 4294901760
  %v1815 = vsub.f32 %v1585, %v1814
  %v1816 = vand.u32 %v1815, 4294901760
  %v1817 = vsub.f32 %v1815, %v1816
  %v1818 = vand.u32 %v1817, 4294901760
  %1819 = vmatpush.msra.mxu0 %v1818
  %v1820 = vand.u32 %v1584, 4294901760
  %v1821 = vsub.f32 %v1584, %v1820
  %v1822 = vand.u32 %v1821, 4294901760
  %v1823 = vsub.f32 %v1821, %v1822
  %v1824 = vand.u32 %v1823, 4294901760
  %1825 = vmatpush.msra.mxu0 %v1824
  %v1826 = vand.u32 %v1583, 4294901760
  %v1827 = vsub.f32 %v1583, %v1826
  %v1828 = vand.u32 %v1827, 4294901760
  %v1829 = vsub.f32 %v1827, %v1828
  %v1830 = vand.u32 %v1829, 4294901760
  %1831 = vmatpush.msra.mxu0 %v1830
  %v1832 = vand.u32 %v1582, 4294901760
  %v1833 = vsub.f32 %v1582, %v1832
  %v1834 = vand.u32 %v1833, 4294901760
  %v1835 = vsub.f32 %v1833, %v1834
  %v1836 = vand.u32 %v1835, 4294901760
  %1837 = vmatpush.msra.mxu0 %v1836
  %v1838 = vand.u32 %v1581, 4294901760
  %v1839 = vsub.f32 %v1581, %v1838
  %v1840 = vand.u32 %v1839, 4294901760
  %v1841 = vsub.f32 %v1839, %v1840
  %v1842 = vand.u32 %v1841, 4294901760
  %1843 = vmatpush.msra.mxu0 %v1842
  %v1844 = vand.u32 %v1580, 4294901760
  %v1845 = vsub.f32 %v1580, %v1844
  %v1846 = vand.u32 %v1845, 4294901760
  %v1847 = vsub.f32 %v1845, %v1846
  %v1848 = vand.u32 %v1847, 4294901760
  %1849 = vmatpush.msra.mxu0 %v1848
  %v1850 = vand.u32 %v1579, 4294901760
  %v1851 = vsub.f32 %v1579, %v1850
  %v1852 = vand.u32 %v1851, 4294901760
  %v1853 = vsub.f32 %v1851, %v1852
  %v1854 = vand.u32 %v1853, 4294901760
  %1855 = vmatpush.msra.mxu0 %v1854
  %v1856 = vand.u32 %v1563, 4294901760
  %1857 = vmatmul.f32.gmra.mxu0 %v1856
  %v1858 = vpop.f32.mrf.mxu0
  %v1859 = vadd.f32 %v1638, %v1858
  %v1860 = vand.u32 %v1564, 4294901760
  %1861 = vmatmul.f32.gmra.mxu0 %v1860
  %v1862 = vpop.f32.mrf.mxu0
  %v1863 = vadd.f32 %v1646, %v1862
  %v1864 = vand.u32 %v1565, 4294901760
  %1865 = vmatmul.f32.gmra.mxu0 %v1864
  %v1866 = vpop.f32.mrf.mxu0
  %v1867 = vadd.f32 %v1654, %v1866
  %v1868 = vand.u32 %v1566, 4294901760
  %1869 = vmatmul.f32.gmra.mxu0 %v1868
  %v1870 = vpop.f32.mrf.mxu0
  %v1871 = vadd.f32 %v1662, %v1870
  %v1872 = vand.u32 %v1567, 4294901760
  %1873 = vmatmul.f32.gmra.mxu0 %v1872
  %v1874 = vpop.f32.mrf.mxu0
  %v1875 = vadd.f32 %v1670, %v1874
  %v1876 = vand.u32 %v1568, 4294901760
  %1877 = vmatmul.f32.gmra.mxu0 %v1876
  %v1878 = vpop.f32.mrf.mxu0
  %v1879 = vadd.f32 %v1678, %v1878
  %v1880 = vand.u32 %v1569, 4294901760
  %1881 = vmatmul.f32.gmra.mxu0 %v1880
  %v1882 = vpop.f32.mrf.mxu0
  %v1883 = vadd.f32 %v1686, %v1882
  %v1884 = vand.u32 %v1570, 4294901760
  %1885 = vmatmul.f32.gmra.mxu0 %v1884
  %v1886 = vpop.f32.mrf.mxu0
  %v1887 = vadd.f32 %v1694, %v1886
  %v1888 = vand.u32 %v1571, 4294901760
  %1889 = vmatmul.f32.gmra.mxu0 %v1888
  %v1890 = vpop.f32.mrf.mxu0
  %v1891 = vadd.f32 %v1702, %v1890
  %v1892 = vand.u32 %v1572, 4294901760
  %1893 = vmatmul.f32.gmra.mxu0 %v1892
  %v1894 = vpop.f32.mrf.mxu0
  %v1895 = vadd.f32 %v1710, %v1894
  %v1896 = vand.u32 %v1573, 4294901760
  %1897 = vmatmul.f32.gmra.mxu0 %v1896
  %v1898 = vpop.f32.mrf.mxu0
  %v1899 = vadd.f32 %v1718, %v1898
  %v1900 = vand.u32 %v1574, 4294901760
  %1901 = vmatmul.f32.gmra.mxu0 %v1900
  %v1902 = vpop.f32.mrf.mxu0
  %v1903 = vadd.f32 %v1726, %v1902
  %v1904 = vand.u32 %v1575, 4294901760
  %1905 = vmatmul.f32.gmra.mxu0 %v1904
  %v1906 = vpop.f32.mrf.mxu0
  %v1907 = vadd.f32 %v1734, %v1906
  %v1908 = vand.u32 %v1576, 4294901760
  %1909 = vmatmul.f32.gmra.mxu0 %v1908
  %v1910 = vpop.f32.mrf.mxu0
  %v1911 = vadd.f32 %v1742, %v1910
  %v1912 = vand.u32 %v1577, 4294901760
  %1913 = vmatmul.f32.gmra.mxu0 %v1912
  %v1914 = vpop.f32.mrf.mxu0
  %v1915 = vadd.f32 %v1750, %v1914
  %v1916 = vand.u32 %v1578, 4294901760
  %1917 = vmatmul.f32.gmra.mxu0 %v1916
  %v1918 = vpop.f32.mrf.mxu0
  %v1919 = vadd.f32 %v1758, %v1918
  %1920 = vdwg.mxu0
  %v1921 = vand.u32 %v1594, 4294901760
  %v1922 = vsub.f32 %v1594, %v1921
  %1923 = vmatpush.msra.mxu0 %v1922
  %v1924 = vand.u32 %v1593, 4294901760
  %v1925 = vsub.f32 %v1593, %v1924
  %1926 = vmatpush.msra.mxu0 %v1925
  %v1927 = vand.u32 %v1592, 4294901760
  %v1928 = vsub.f32 %v1592, %v1927
  %1929 = vmatpush.msra.mxu0 %v1928
  %v1930 = vand.u32 %v1591, 4294901760
  %v1931 = vsub.f32 %v1591, %v1930
  %1932 = vmatpush.msra.mxu0 %v1931
  %v1933 = vand.u32 %v1590, 4294901760
  %v1934 = vsub.f32 %v1590, %v1933
  %1935 = vmatpush.msra.mxu0 %v1934
  %v1936 = vand.u32 %v1589, 4294901760
  %v1937 = vsub.f32 %v1589, %v1936
  %1938 = vmatpush.msra.mxu0 %v1937
  %v1939 = vand.u32 %v1588, 4294901760
  %v1940 = vsub.f32 %v1588, %v1939
  %1941 = vmatpush.msra.mxu0 %v1940
  %v1942 = vand.u32 %v1587, 4294901760
  %v1943 = vsub.f32 %v1587, %v1942
  %1944 = vmatpush.msra.mxu0 %v1943
  %v1945 = vand.u32 %v1586, 4294901760
  %v1946 = vsub.f32 %v1586, %v1945
  %1947 = vmatpush.msra.mxu0 %v1946
  %v1948 = vand.u32 %v1585, 4294901760
  %v1949 = vsub.f32 %v1585, %v1948
  %1950 = vmatpush.msra.mxu0 %v1949
  %v1951 = vand.u32 %v1584, 4294901760
  %v1952 = vsub.f32 %v1584, %v1951
  %1953 = vmatpush.msra.mxu0 %v1952
  %v1954 = vand.u32 %v1583, 4294901760
  %v1955 = vsub.f32 %v1583, %v1954
  %1956 = vmatpush.msra.mxu0 %v1955
  %v1957 = vand.u32 %v1582, 4294901760
  %v1958 = vsub.f32 %v1582, %v1957
  %1959 = vmatpush.msra.mxu0 %v1958
  %v1960 = vand.u32 %v1581, 4294901760
  %v1961 = vsub.f32 %v1581, %v1960
  %1962 = vmatpush.msra.mxu0 %v1961
  %v1963 = vand.u32 %v1580, 4294901760
  %v1964 = vsub.f32 %v1580, %v1963
  %1965 = vmatpush.msra.mxu0 %v1964
  %v1966 = vand.u32 %v1579, 4294901760
  %v1967 = vsub.f32 %v1579, %v1966
  %1968 = vmatpush.msra.mxu0 %v1967
  %v1969 = vand.u32 %v1563, 4294901760
  %v1970 = vsub.f32 %v1563, %v1969
  %1971 = vmatmul.f32.gmra.mxu0 %v1970
  %v1972 = vpop.f32.mrf.mxu0
  %v1973 = vadd.f32 %v1859, %v1972
  %v1974 = vand.u32 %v1564, 4294901760
  %v1975 = vsub.f32 %v1564, %v1974
  %1976 = vmatmul.f32.gmra.mxu0 %v1975
  %v1977 = vpop.f32.mrf.mxu0
  %v1978 = vadd.f32 %v1863, %v1977
  %v1979 = vand.u32 %v1565, 4294901760
  %v1980 = vsub.f32 %v1565, %v1979
  %1981 = vmatmul.f32.gmra.mxu0 %v1980
  %v1982 = vpop.f32.mrf.mxu0
  %v1983 = vadd.f32 %v1867, %v1982
  %v1984 = vand.u32 %v1566, 4294901760
  %v1985 = vsub.f32 %v1566, %v1984
  %1986 = vmatmul.f32.gmra.mxu0 %v1985
  %v1987 = vpop.f32.mrf.mxu0
  %v1988 = vadd.f32 %v1871, %v1987
  %v1989 = vand.u32 %v1567, 4294901760
  %v1990 = vsub.f32 %v1567, %v1989
  %1991 = vmatmul.f32.gmra.mxu0 %v1990
  %v1992 = vpop.f32.mrf.mxu0
  %v1993 = vadd.f32 %v1875, %v1992
  %v1994 = vand.u32 %v1568, 4294901760
  %v1995 = vsub.f32 %v1568, %v1994
  %1996 = vmatmul.f32.gmra.mxu0 %v1995
  %v1997 = vpop.f32.mrf.mxu0
  %v1998 = vadd.f32 %v1879, %v1997
  %v1999 = vand.u32 %v1569, 4294901760
  %v2000 = vsub.f32 %v1569, %v1999
  %2001 = vmatmul.f32.gmra.mxu0 %v2000
  %v2002 = vpop.f32.mrf.mxu0
  %v2003 = vadd.f32 %v1883, %v2002
  %v2004 = vand.u32 %v1570, 4294901760
  %v2005 = vsub.f32 %v1570, %v2004
  %2006 = vmatmul.f32.gmra.mxu0 %v2005
  %v2007 = vpop.f32.mrf.mxu0
  %v2008 = vadd.f32 %v1887, %v2007
  %v2009 = vand.u32 %v1571, 4294901760
  %v2010 = vsub.f32 %v1571, %v2009
  %2011 = vmatmul.f32.gmra.mxu0 %v2010
  %v2012 = vpop.f32.mrf.mxu0
  %v2013 = vadd.f32 %v1891, %v2012
  %v2014 = vand.u32 %v1572, 4294901760
  %v2015 = vsub.f32 %v1572, %v2014
  %2016 = vmatmul.f32.gmra.mxu0 %v2015
  %v2017 = vpop.f32.mrf.mxu0
  %v2018 = vadd.f32 %v1895, %v2017
  %v2019 = vand.u32 %v1573, 4294901760
  %v2020 = vsub.f32 %v1573, %v2019
  %2021 = vmatmul.f32.gmra.mxu0 %v2020
  %v2022 = vpop.f32.mrf.mxu0
  %v2023 = vadd.f32 %v1899, %v2022
  %v2024 = vand.u32 %v1574, 4294901760
  %v2025 = vsub.f32 %v1574, %v2024
  %2026 = vmatmul.f32.gmra.mxu0 %v2025
  %v2027 = vpop.f32.mrf.mxu0
  %v2028 = vadd.f32 %v1903, %v2027
  %v2029 = vand.u32 %v1575, 4294901760
  %v2030 = vsub.f32 %v1575, %v2029
  %2031 = vmatmul.f32.gmra.mxu0 %v2030
  %v2032 = vpop.f32.mrf.mxu0
  %v2033 = vadd.f32 %v1907, %v2032
  %v2034 = vand.u32 %v1576, 4294901760
  %v2035 = vsub.f32 %v1576, %v2034
  %2036 = vmatmul.f32.gmra.mxu0 %v2035
  %v2037 = vpop.f32.mrf.mxu0
  %v2038 = vadd.f32 %v1911, %v2037
  %v2039 = vand.u32 %v1577, 4294901760
  %v2040 = vsub.f32 %v1577, %v2039
  %2041 = vmatmul.f32.gmra.mxu0 %v2040
  %v2042 = vpop.f32.mrf.mxu0
  %v2043 = vadd.f32 %v1915, %v2042
  %v2044 = vand.u32 %v1578, 4294901760
  %v2045 = vsub.f32 %v1578, %v2044
  %2046 = vmatmul.f32.gmra.mxu0 %v2045
  %v2047 = vpop.f32.mrf.mxu0
  %v2048 = vadd.f32 %v1919, %v2047
  %2049 = vdwg.mxu0
  %v2050 = vand.u32 %v1594, 4294901760
  %2051 = vmatpush.msra.mxu0 %v2050
  %v2052 = vand.u32 %v1593, 4294901760
  %2053 = vmatpush.msra.mxu0 %v2052
  %v2054 = vand.u32 %v1592, 4294901760
  %2055 = vmatpush.msra.mxu0 %v2054
  %v2056 = vand.u32 %v1591, 4294901760
  %2057 = vmatpush.msra.mxu0 %v2056
  %v2058 = vand.u32 %v1590, 4294901760
  %2059 = vmatpush.msra.mxu0 %v2058
  %v2060 = vand.u32 %v1589, 4294901760
  %2061 = vmatpush.msra.mxu0 %v2060
  %v2062 = vand.u32 %v1588, 4294901760
  %2063 = vmatpush.msra.mxu0 %v2062
  %v2064 = vand.u32 %v1587, 4294901760
  %2065 = vmatpush.msra.mxu0 %v2064
  %v2066 = vand.u32 %v1586, 4294901760
  %2067 = vmatpush.msra.mxu0 %v2066
  %v2068 = vand.u32 %v1585, 4294901760
  %2069 = vmatpush.msra.mxu0 %v2068
  %v2070 = vand.u32 %v1584, 4294901760
  %2071 = vmatpush.msra.mxu0 %v2070
  %v2072 = vand.u32 %v1583, 4294901760
  %2073 = vmatpush.msra.mxu0 %v2072
  %v2074 = vand.u32 %v1582, 4294901760
  %2075 = vmatpush.msra.mxu0 %v2074
  %v2076 = vand.u32 %v1581, 4294901760
  %2077 = vmatpush.msra.mxu0 %v2076
  %v2078 = vand.u32 %v1580, 4294901760
  %2079 = vmatpush.msra.mxu0 %v2078
  %v2080 = vand.u32 %v1579, 4294901760
  %2081 = vmatpush.msra.mxu0 %v2080
  %v2082 = vand.u32 %v1563, 4294901760
  %v2083 = vsub.f32 %v1563, %v2082
  %v2084 = vand.u32 %v2083, 4294901760
  %2085 = vmatmul.f32.gmra.mxu0 %v2084
  %v2086 = vpop.f32.mrf.mxu0
  %v2087 = vadd.f32 %v1973, %v2086
  %v2088 = vand.u32 %v1564, 4294901760
  %v2089 = vsub.f32 %v1564, %v2088
  %v2090 = vand.u32 %v2089, 4294901760
  %2091 = vmatmul.f32.gmra.mxu0 %v2090
  %v2092 = vpop.f32.mrf.mxu0
  %v2093 = vadd.f32 %v1978, %v2092
  %v2094 = vand.u32 %v1565, 4294901760
  %v2095 = vsub.f32 %v1565, %v2094
  %v2096 = vand.u32 %v2095, 4294901760
  %2097 = vmatmul.f32.gmra.mxu0 %v2096
  %v2098 = vpop.f32.mrf.mxu0
  %v2099 = vadd.f32 %v1983, %v2098
  %v2100 = vand.u32 %v1566, 4294901760
  %v2101 = vsub.f32 %v1566, %v2100
  %v2102 = vand.u32 %v2101, 4294901760
  %2103 = vmatmul.f32.gmra.mxu0 %v2102
  %v2104 = vpop.f32.mrf.mxu0
  %v2105 = vadd.f32 %v1988, %v2104
  %v2106 = vand.u32 %v1567, 4294901760
  %v2107 = vsub.f32 %v1567, %v2106
  %v2108 = vand.u32 %v2107, 4294901760
  %2109 = vmatmul.f32.gmra.mxu0 %v2108
  %v2110 = vpop.f32.mrf.mxu0
  %v2111 = vadd.f32 %v1993, %v2110
  %v2112 = vand.u32 %v1568, 4294901760
  %v2113 = vsub.f32 %v1568, %v2112
  %v2114 = vand.u32 %v2113, 4294901760
  %2115 = vmatmul.f32.gmra.mxu0 %v2114
  %v2116 = vpop.f32.mrf.mxu0
  %v2117 = vadd.f32 %v1998, %v2116
  %v2118 = vand.u32 %v1569, 4294901760
  %v2119 = vsub.f32 %v1569, %v2118
  %v2120 = vand.u32 %v2119, 4294901760
  %2121 = vmatmul.f32.gmra.mxu0 %v2120
  %v2122 = vpop.f32.mrf.mxu0
  %v2123 = vadd.f32 %v2003, %v2122
  %v2124 = vand.u32 %v1570, 4294901760
  %v2125 = vsub.f32 %v1570, %v2124
  %v2126 = vand.u32 %v2125, 4294901760
  %2127 = vmatmul.f32.gmra.mxu0 %v2126
  %v2128 = vpop.f32.mrf.mxu0
  %v2129 = vadd.f32 %v2008, %v2128
  %v2130 = vand.u32 %v1571, 4294901760
  %v2131 = vsub.f32 %v1571, %v2130
  %v2132 = vand.u32 %v2131, 4294901760
  %2133 = vmatmul.f32.gmra.mxu0 %v2132
  %v2134 = vpop.f32.mrf.mxu0
  %v2135 = vadd.f32 %v2013, %v2134
  %v2136 = vand.u32 %v1572, 4294901760
  %v2137 = vsub.f32 %v1572, %v2136
  %v2138 = vand.u32 %v2137, 4294901760
  %2139 = vmatmul.f32.gmra.mxu0 %v2138
  %v2140 = vpop.f32.mrf.mxu0
  %v2141 = vadd.f32 %v2018, %v2140
  %v2142 = vand.u32 %v1573, 4294901760
  %v2143 = vsub.f32 %v1573, %v2142
  %v2144 = vand.u32 %v2143, 4294901760
  %2145 = vmatmul.f32.gmra.mxu0 %v2144
  %v2146 = vpop.f32.mrf.mxu0
  %v2147 = vadd.f32 %v2023, %v2146
  %v2148 = vand.u32 %v1574, 4294901760
  %v2149 = vsub.f32 %v1574, %v2148
  %v2150 = vand.u32 %v2149, 4294901760
  %2151 = vmatmul.f32.gmra.mxu0 %v2150
  %v2152 = vpop.f32.mrf.mxu0
  %v2153 = vadd.f32 %v2028, %v2152
  %v2154 = vand.u32 %v1575, 4294901760
  %v2155 = vsub.f32 %v1575, %v2154
  %v2156 = vand.u32 %v2155, 4294901760
  %2157 = vmatmul.f32.gmra.mxu0 %v2156
  %v2158 = vpop.f32.mrf.mxu0
  %v2159 = vadd.f32 %v2033, %v2158
  %v2160 = vand.u32 %v1576, 4294901760
  %v2161 = vsub.f32 %v1576, %v2160
  %v2162 = vand.u32 %v2161, 4294901760
  %2163 = vmatmul.f32.gmra.mxu0 %v2162
  %v2164 = vpop.f32.mrf.mxu0
  %v2165 = vadd.f32 %v2038, %v2164
  %v2166 = vand.u32 %v1577, 4294901760
  %v2167 = vsub.f32 %v1577, %v2166
  %v2168 = vand.u32 %v2167, 4294901760
  %2169 = vmatmul.f32.gmra.mxu0 %v2168
  %v2170 = vpop.f32.mrf.mxu0
  %v2171 = vadd.f32 %v2043, %v2170
  %v2172 = vand.u32 %v1578, 4294901760
  %v2173 = vsub.f32 %v1578, %v2172
  %v2174 = vand.u32 %v2173, 4294901760
  %2175 = vmatmul.f32.gmra.mxu0 %v2174
  %v2176 = vpop.f32.mrf.mxu0
  %v2177 = vadd.f32 %v2048, %v2176
  %2178 = vdwg.mxu0
  %v2179 = vand.u32 %v1594, 4294901760
  %v2180 = vsub.f32 %v1594, %v2179
  %v2181 = vand.u32 %v2180, 4294901760
  %2182 = vmatpush.msra.mxu0 %v2181
  %v2183 = vand.u32 %v1593, 4294901760
  %v2184 = vsub.f32 %v1593, %v2183
  %v2185 = vand.u32 %v2184, 4294901760
  %2186 = vmatpush.msra.mxu0 %v2185
  %v2187 = vand.u32 %v1592, 4294901760
  %v2188 = vsub.f32 %v1592, %v2187
  %v2189 = vand.u32 %v2188, 4294901760
  %2190 = vmatpush.msra.mxu0 %v2189
  %v2191 = vand.u32 %v1591, 4294901760
  %v2192 = vsub.f32 %v1591, %v2191
  %v2193 = vand.u32 %v2192, 4294901760
  %2194 = vmatpush.msra.mxu0 %v2193
  %v2195 = vand.u32 %v1590, 4294901760
  %v2196 = vsub.f32 %v1590, %v2195
  %v2197 = vand.u32 %v2196, 4294901760
  %2198 = vmatpush.msra.mxu0 %v2197
  %v2199 = vand.u32 %v1589, 4294901760
  %v2200 = vsub.f32 %v1589, %v2199
  %v2201 = vand.u32 %v2200, 4294901760
  %2202 = vmatpush.msra.mxu0 %v2201
  %v2203 = vand.u32 %v1588, 4294901760
  %v2204 = vsub.f32 %v1588, %v2203
  %v2205 = vand.u32 %v2204, 4294901760
  %2206 = vmatpush.msra.mxu0 %v2205
  %v2207 = vand.u32 %v1587, 4294901760
  %v2208 = vsub.f32 %v1587, %v2207
  %v2209 = vand.u32 %v2208, 4294901760
  %2210 = vmatpush.msra.mxu0 %v2209
  %v2211 = vand.u32 %v1586, 4294901760
  %v2212 = vsub.f32 %v1586, %v2211
  %v2213 = vand.u32 %v2212, 4294901760
  %2214 = vmatpush.msra.mxu0 %v2213
  %v2215 = vand.u32 %v1585, 4294901760
  %v2216 = vsub.f32 %v1585, %v2215
  %v2217 = vand.u32 %v2216, 4294901760
  %2218 = vmatpush.msra.mxu0 %v2217
  %v2219 = vand.u32 %v1584, 4294901760
  %v2220 = vsub.f32 %v1584, %v2219
  %v2221 = vand.u32 %v2220, 4294901760
  %2222 = vmatpush.msra.mxu0 %v2221
  %v2223 = vand.u32 %v1583, 4294901760
  %v2224 = vsub.f32 %v1583, %v2223
  %v2225 = vand.u32 %v2224, 4294901760
  %2226 = vmatpush.msra.mxu0 %v2225
  %v2227 = vand.u32 %v1582, 4294901760
  %v2228 = vsub.f32 %v1582, %v2227
  %v2229 = vand.u32 %v2228, 4294901760
  %2230 = vmatpush.msra.mxu0 %v2229
  %v2231 = vand.u32 %v1581, 4294901760
  %v2232 = vsub.f32 %v1581, %v2231
  %v2233 = vand.u32 %v2232, 4294901760
  %2234 = vmatpush.msra.mxu0 %v2233
  %v2235 = vand.u32 %v1580, 4294901760
  %v2236 = vsub.f32 %v1580, %v2235
  %v2237 = vand.u32 %v2236, 4294901760
  %2238 = vmatpush.msra.mxu0 %v2237
  %v2239 = vand.u32 %v1579, 4294901760
  %v2240 = vsub.f32 %v1579, %v2239
  %v2241 = vand.u32 %v2240, 4294901760
  %2242 = vmatpush.msra.mxu0 %v2241
  %v2243 = vand.u32 %v1563, 4294901760
  %2244 = vmatmul.f32.gmra.mxu0 %v2243
  %v2245 = vpop.f32.mrf.mxu0
  %v2246 = vadd.f32 %v2087, %v2245
  %v2247 = vand.u32 %v1564, 4294901760
  %2248 = vmatmul.f32.gmra.mxu0 %v2247
  %v2249 = vpop.f32.mrf.mxu0
  %v2250 = vadd.f32 %v2093, %v2249
  %v2251 = vand.u32 %v1565, 4294901760
  %2252 = vmatmul.f32.gmra.mxu0 %v2251
  %v2253 = vpop.f32.mrf.mxu0
  %v2254 = vadd.f32 %v2099, %v2253
  %v2255 = vand.u32 %v1566, 4294901760
  %2256 = vmatmul.f32.gmra.mxu0 %v2255
  %v2257 = vpop.f32.mrf.mxu0
  %v2258 = vadd.f32 %v2105, %v2257
  %v2259 = vand.u32 %v1567, 4294901760
  %2260 = vmatmul.f32.gmra.mxu0 %v2259
  %v2261 = vpop.f32.mrf.mxu0
  %v2262 = vadd.f32 %v2111, %v2261
  %v2263 = vand.u32 %v1568, 4294901760
  %2264 = vmatmul.f32.gmra.mxu0 %v2263
  %v2265 = vpop.f32.mrf.mxu0
  %v2266 = vadd.f32 %v2117, %v2265
  %v2267 = vand.u32 %v1569, 4294901760
  %2268 = vmatmul.f32.gmra.mxu0 %v2267
  %v2269 = vpop.f32.mrf.mxu0
  %v2270 = vadd.f32 %v2123, %v2269
  %v2271 = vand.u32 %v1570, 4294901760
  %2272 = vmatmul.f32.gmra.mxu0 %v2271
  %v2273 = vpop.f32.mrf.mxu0
  %v2274 = vadd.f32 %v2129, %v2273
  %v2275 = vand.u32 %v1571, 4294901760
  %2276 = vmatmul.f32.gmra.mxu0 %v2275
  %v2277 = vpop.f32.mrf.mxu0
  %v2278 = vadd.f32 %v2135, %v2277
  %v2279 = vand.u32 %v1572, 4294901760
  %2280 = vmatmul.f32.gmra.mxu0 %v2279
  %v2281 = vpop.f32.mrf.mxu0
  %v2282 = vadd.f32 %v2141, %v2281
  %v2283 = vand.u32 %v1573, 4294901760
  %2284 = vmatmul.f32.gmra.mxu0 %v2283
  %v2285 = vpop.f32.mrf.mxu0
  %v2286 = vadd.f32 %v2147, %v2285
  %v2287 = vand.u32 %v1574, 4294901760
  %2288 = vmatmul.f32.gmra.mxu0 %v2287
  %v2289 = vpop.f32.mrf.mxu0
  %v2290 = vadd.f32 %v2153, %v2289
  %v2291 = vand.u32 %v1575, 4294901760
  %2292 = vmatmul.f32.gmra.mxu0 %v2291
  %v2293 = vpop.f32.mrf.mxu0
  %v2294 = vadd.f32 %v2159, %v2293
  %v2295 = vand.u32 %v1576, 4294901760
  %2296 = vmatmul.f32.gmra.mxu0 %v2295
  %v2297 = vpop.f32.mrf.mxu0
  %v2298 = vadd.f32 %v2165, %v2297
  %v2299 = vand.u32 %v1577, 4294901760
  %2300 = vmatmul.f32.gmra.mxu0 %v2299
  %v2301 = vpop.f32.mrf.mxu0
  %v2302 = vadd.f32 %v2171, %v2301
  %v2303 = vand.u32 %v1578, 4294901760
  %2304 = vmatmul.f32.gmra.mxu0 %v2303
  %v2305 = vpop.f32.mrf.mxu0
  %v2306 = vadd.f32 %v2177, %v2305
  %2307 = vdwg.mxu0
  %v2308 = vand.u32 %v1594, 4294901760
  %2309 = vmatpush.msra.mxu0 %v2308
  %v2310 = vand.u32 %v1593, 4294901760
  %2311 = vmatpush.msra.mxu0 %v2310
  %v2312 = vand.u32 %v1592, 4294901760
  %2313 = vmatpush.msra.mxu0 %v2312
  %v2314 = vand.u32 %v1591, 4294901760
  %2315 = vmatpush.msra.mxu0 %v2314
  %v2316 = vand.u32 %v1590, 4294901760
  %2317 = vmatpush.msra.mxu0 %v2316
  %v2318 = vand.u32 %v1589, 4294901760
  %2319 = vmatpush.msra.mxu0 %v2318
  %v2320 = vand.u32 %v1588, 4294901760
  %2321 = vmatpush.msra.mxu0 %v2320
  %v2322 = vand.u32 %v1587, 4294901760
  %2323 = vmatpush.msra.mxu0 %v2322
  %v2324 = vand.u32 %v1586, 4294901760
  %2325 = vmatpush.msra.mxu0 %v2324
  %v2326 = vand.u32 %v1585, 4294901760
  %2327 = vmatpush.msra.mxu0 %v2326
  %v2328 = vand.u32 %v1584, 4294901760
  %2329 = vmatpush.msra.mxu0 %v2328
  %v2330 = vand.u32 %v1583, 4294901760
  %2331 = vmatpush.msra.mxu0 %v2330
  %v2332 = vand.u32 %v1582, 4294901760
  %2333 = vmatpush.msra.mxu0 %v2332
  %v2334 = vand.u32 %v1581, 4294901760
  %2335 = vmatpush.msra.mxu0 %v2334
  %v2336 = vand.u32 %v1580, 4294901760
  %2337 = vmatpush.msra.mxu0 %v2336
  %v2338 = vand.u32 %v1579, 4294901760
  %2339 = vmatpush.msra.mxu0 %v2338
  %v2340 = vand.u32 %v1563, 4294901760
  %2341 = vmatmul.f32.gmra.mxu0 %v2340
  %v2342 = vpop.f32.mrf.mxu0
  %v2343 = vadd.f32 %v2246, %v2342
  %v2344 = vand.u32 %v1564, 4294901760
  %2345 = vmatmul.f32.gmra.mxu0 %v2344
  %v2346 = vpop.f32.mrf.mxu0
  %v2347 = vadd.f32 %v2250, %v2346
  %v2348 = vand.u32 %v1565, 4294901760
  %2349 = vmatmul.f32.gmra.mxu0 %v2348
  %v2350 = vpop.f32.mrf.mxu0
  %v2351 = vadd.f32 %v2254, %v2350
  %v2352 = vand.u32 %v1566, 4294901760
  %2353 = vmatmul.f32.gmra.mxu0 %v2352
  %v2354 = vpop.f32.mrf.mxu0
  %v2355 = vadd.f32 %v2258, %v2354
  %v2356 = vand.u32 %v1567, 4294901760
  %2357 = vmatmul.f32.gmra.mxu0 %v2356
  %v2358 = vpop.f32.mrf.mxu0
  %v2359 = vadd.f32 %v2262, %v2358
  %v2360 = vand.u32 %v1568, 4294901760
  %2361 = vmatmul.f32.gmra.mxu0 %v2360
  %v2362 = vpop.f32.mrf.mxu0
  %v2363 = vadd.f32 %v2266, %v2362
  %v2364 = vand.u32 %v1569, 4294901760
  %2365 = vmatmul.f32.gmra.mxu0 %v2364
  %v2366 = vpop.f32.mrf.mxu0
  %v2367 = vadd.f32 %v2270, %v2366
  %v2368 = vand.u32 %v1570, 4294901760
  %2369 = vmatmul.f32.gmra.mxu0 %v2368
  %v2370 = vpop.f32.mrf.mxu0
  %v2371 = vadd.f32 %v2274, %v2370
  %v2372 = vand.u32 %v1571, 4294901760
  %2373 = vmatmul.f32.gmra.mxu0 %v2372
  %v2374 = vpop.f32.mrf.mxu0
  %v2375 = vadd.f32 %v2278, %v2374
  %v2376 = vand.u32 %v1572, 4294901760
  %2377 = vmatmul.f32.gmra.mxu0 %v2376
  %v2378 = vpop.f32.mrf.mxu0
  %v2379 = vadd.f32 %v2282, %v2378
  %v2380 = vand.u32 %v1573, 4294901760
  %2381 = vmatmul.f32.gmra.mxu0 %v2380
  %v2382 = vpop.f32.mrf.mxu0
  %v2383 = vadd.f32 %v2286, %v2382
  %v2384 = vand.u32 %v1574, 4294901760
  %2385 = vmatmul.f32.gmra.mxu0 %v2384
  %v2386 = vpop.f32.mrf.mxu0
  %v2387 = vadd.f32 %v2290, %v2386
  %v2388 = vand.u32 %v1575, 4294901760
  %2389 = vmatmul.f32.gmra.mxu0 %v2388
  %v2390 = vpop.f32.mrf.mxu0
  %v2391 = vadd.f32 %v2294, %v2390
  %v2392 = vand.u32 %v1576, 4294901760
  %2393 = vmatmul.f32.gmra.mxu0 %v2392
  %v2394 = vpop.f32.mrf.mxu0
  %v2395 = vadd.f32 %v2298, %v2394
  %v2396 = vand.u32 %v1577, 4294901760
  %2397 = vmatmul.f32.gmra.mxu0 %v2396
  %v2398 = vpop.f32.mrf.mxu0
  %v2399 = vadd.f32 %v2302, %v2398
  %v2400 = vand.u32 %v1578, 4294901760
  %2401 = vmatmul.f32.gmra.mxu0 %v2400
  %v2402 = vpop.f32.mrf.mxu0
  %v2403 = vadd.f32 %v2306, %v2402
  %2404 = vdwg.mxu0
  %2405 = vxpose.xlu0.b32.start [1/16] %v2343, 128
  %2406 = vxpose.xlu0.b32.cont [2/16] %v2347, 128
  %2407 = vxpose.xlu0.b32.cont [3/16] %v2351, 128
  %2408 = vxpose.xlu0.b32.cont [4/16] %v2355, 128
  %2409 = vxpose.xlu0.b32.cont [5/16] %v2359, 128
  %2410 = vxpose.xlu0.b32.cont [6/16] %v2363, 128
  %2411 = vxpose.xlu0.b32.cont [7/16] %v2367, 128
  %2412 = vxpose.xlu0.b32.cont [8/16] %v2371, 128
  %2413 = vxpose.xlu0.b32.cont [9/16] %v2375, 128
  %2414 = vxpose.xlu0.b32.cont [10/16] %v2379, 128
  %2415 = vxpose.xlu0.b32.cont [11/16] %v2383, 128
  %2416 = vxpose.xlu0.b32.cont [12/16] %v2387, 128
  %2417 = vxpose.xlu0.b32.cont [13/16] %v2391, 128
  %2418 = vxpose.xlu0.b32.cont [14/16] %v2395, 128
  %2419 = vxpose.xlu0.b32.cont [15/16] %v2399, 128
  %2420 = vxpose.xlu0.b32.end [16/16] %v2403, 128
  %v2421 = vpop.trf.xlu0
  %v2422 = vpop.trf.xlu0
  %v2423 = vpop.trf.xlu0
  %v2424 = vpop.trf.xlu0
  %v2425 = vpop.trf.xlu0
  %v2426 = vpop.trf.xlu0
  %v2427 = vpop.trf.xlu0
  %v2428 = vpop.trf.xlu0
  %v2429 = vpop.trf.xlu0
  %v2430 = vpop.trf.xlu0
  %v2431 = vpop.trf.xlu0
  %v2432 = vpop.trf.xlu0
  %v2433 = vpop.trf.xlu0
  %v2434 = vpop.trf.xlu0
  %v2435 = vpop.trf.xlu0
  %v2436 = vpop.trf.xlu0
  %2437 = vst [vmem:[%s7] sm:$0x1] %v2421
  // Predicated region
  $region30: #{_forward.1} parent=0 // pred_check
    _
  $region31: #{_forward.1} parent=0 // pred_check_branch
    %2439 = sbr.rel (0) target = $region33
  $region32: #{_forward.1} parent=0 // pred_region
    _
  $region33: #{_forward.1} parent=0 // pred_fallthru
    _
  // Predicated region
  $region34: #{_forward.1} parent=0 // pred_check
    _
  $region35: #{_forward.1} parent=0 // pred_check_branch
    %2441 = sbr.rel (0) target = $region37
  $region36: #{_forward.1} parent=0 // pred_region
    _
  $region37: #{_forward.1} parent=0 // pred_fallthru
    _

</llo_original>
